<compile_context>
chip_gen: v5e
topology: v5e:2x2
jax: 0.10.0
libtpu: 0.0.40
codegen_flags: <defaults>
</compile_context>

<pallas_src>
import jax
import jax.numpy as jnp
import numpy as np
from jax.experimental import pallas as pl
from jax.experimental.pallas import tpu as pltpu


def rnn_decoder_kernel(x_ref, keys2d_ref, query_ref,
                       wq_ref, bq_ref, wkv_ref, bkv_ref, wp_ref, bp_ref,
                       wih_ref, bih_ref, whh_ref, bhh_ref,
                       wout_ref, bout_ref,
                       logits_ref, lse_ref, state_ref, attn_ref,
                       m_scr, l_scr):
    j = pl.program_id(0)
    last = pl.num_programs(0) - 1
    Bp, H = query_ref.shape
    S = attn_ref.shape[1]

    # ----- attention + single-step GRU: computed once, results stay VMEM-resident -----
    @pl.when(j == 0)
    def _():
        x = x_ref[...]                                   # (Bp, E)
        q = query_ref[...]                               # (Bp, H)

        # fused K/V projection: bf16 operands on the MXU, f32 accumulation
        kv2d = jnp.dot(keys2d_ref[...].astype(jnp.bfloat16), wkv_ref[...],
                       preferred_element_type=jnp.float32) + bkv_ref[...]    # (Bp*S, 2H)
        k_proj = kv2d[:, :H].reshape(Bp, S, H)
        v_proj = kv2d[:, H:].reshape(Bp, S, H)

        q_proj = jnp.dot(q, wq_ref[...],
                         preferred_element_type=jnp.float32) + bq_ref[...]   # (Bp, H)
        score = jnp.tanh(k_proj + q_proj[:, None, :])                        # (Bp, S, H)

        # proj: Linear(H, 1) as multiply-reduce over H; lane-dense logits (Bp, S)
        att = jnp.sum(score * wp_ref[...], axis=-1) + bp_ref[...]            # (Bp, S)
        att_m = jnp.max(att, axis=-1, keepdims=True)
        att_e = jnp.exp(att - att_m)
        aw = att_e / jnp.sum(att_e, axis=-1, keepdims=True)                  # (Bp, S)
        context = jnp.sum(aw[:, :, None] * v_proj, axis=1)                   # (Bp, H)

        # single-step GRU (PyTorch gate order r, z, n), h_prev = context
        gi = jnp.dot(x, wih_ref[...],
                     preferred_element_type=jnp.float32) + bih_ref[...]      # (Bp, 3H)
        gh = jnp.dot(context, whh_ref[...],
                     preferred_element_type=jnp.float32) + bhh_ref[...]      # (Bp, 3H)
        r = jax.nn.sigmoid(gi[:, 0 * H:1 * H] + gh[:, 0 * H:1 * H])
        z = jax.nn.sigmoid(gi[:, 1 * H:2 * H] + gh[:, 1 * H:2 * H])
        n = jnp.tanh(gi[:, 2 * H:3 * H] + r * gh[:, 2 * H:3 * H])
        h_new = (1.0 - z) * n + z * context                                  # (Bp, H)

        state_ref[...] = h_new
        attn_ref[...] = aw
        m_scr[...] = jnp.full(m_scr.shape, -jnp.inf, jnp.float32)
        l_scr[...] = jnp.zeros(l_scr.shape, jnp.float32)

    # ----- every grid step: one vocab tile of the output projection + online logsumexp -----
    h = state_ref[...]                                                       # (Bp, H) resident
    logits_v = jnp.dot(h.astype(jnp.bfloat16), wout_ref[...],
                       preferred_element_type=jnp.float32) + bout_ref[...]   # (Bp, TILE_V)
    logits_ref[...] = logits_v

    t_max = jnp.max(logits_v, axis=-1, keepdims=True)                        # (Bp, 1)
    m_old = m_scr[...]
    m_new = jnp.maximum(m_old, t_max)
    l_scr[...] = (l_scr[...] * jnp.exp(m_old - m_new)
                  + jnp.sum(jnp.exp(logits_v - m_new), axis=-1, keepdims=True))
    m_scr[...] = m_new

    @pl.when(j == last)
    def _():
        lse_ref[...] = m_scr[...] + jnp.log(l_scr[...])


def rnn_decoder_forward(input_ids, keys, query, params, *, tile_v=None):
    """input_ids: (B, 1) int32 token ids; keys: (B, S, E); query: (B, H)."""
    B, S, E = keys.shape
    H = query.shape[1]
    V = params["wout"].shape[1]

    # vocab tile: lane-aligned (multiple of 128) and dividing V; size it well below
    # VMEM (v7x has only 64 MiB physical / 32 MiB default scoped per TensorCore).
    if tile_v is None:
        tile_v = min(V, 512)
    tile_v = min(tile_v, V)
    if V % tile_v != 0 or tile_v % 128 != 0:
        tile_v = V                      # single full-width tile is always a legal block
    num_v_tiles = V // tile_v

    # embedding lookup (gather) is glue, done in plain JAX
    x = params["emb"][input_ids[:, 0]]                                   # (B, E)

    # pad batch up to the sublane count (8): extra MXU rows are essentially free
    B_pad = ((B + 7) // 8) * 8
    if B_pad != B:
        x = jnp.pad(x, ((0, B_pad - B), (0, 0)))
        keys = jnp.pad(keys, ((0, B_pad - B), (0, 0), (0, 0)))
        query = jnp.pad(query, ((0, B_pad - B), (0, 0)))

    # wrapper-side layout plumbing: flatten keys, fuse K/V weights, bf16 big weights
    keys2d = keys.reshape(B_pad * S, E)
    wkv = jnp.concatenate([params["wk"], params["wv"]], axis=1).astype(jnp.bfloat16)
    bkv = jnp.concatenate([params["bk"], params["bv"]], axis=1)
    wout = params["wout"].astype(jnp.bfloat16)

    const = lambda j: (0, 0)
    in_specs = [
        pl.BlockSpec((B_pad, E), const),                # x
        pl.BlockSpec((B_pad * S, E), const),            # keys (flattened)
        pl.BlockSpec((B_pad, H), const),                # query
        pl.BlockSpec((H, H), const),                    # wq
        pl.BlockSpec((1, H), const),                    # bq
        pl.BlockSpec((E, 2 * H), const),                # wkv (bf16)
        pl.BlockSpec((1, 2 * H), const),                # bkv
        pl.BlockSpec((1, H), const),                    # wp
        pl.BlockSpec((1, 1), const),                    # bp
        pl.BlockSpec((E, 3 * H), const),                # wih
        pl.BlockSpec((1, 3 * H), const),                # bih
        pl.BlockSpec((H, 3 * H), const),                # whh
        pl.BlockSpec((1, 3 * H), const),                # bhh
        pl.BlockSpec((H, tile_v), lambda j: (0, j)),    # wout (bf16), streamed over V
        pl.BlockSpec((1, tile_v), lambda j: (0, j)),    # bout
    ]
    out_specs = (
        pl.BlockSpec((B_pad, tile_v), lambda j: (0, j)),  # raw output logits (per V tile)
        pl.BlockSpec((B_pad, 1), const),                  # logsumexp over the vocab
        pl.BlockSpec((B_pad, H), const),                  # new hidden state
        pl.BlockSpec((B_pad, S), const),                  # attention weights (lane-dense)
    )
    out_shape = (
        jax.ShapeDtypeStruct((B_pad, V), jnp.float32),
        jax.ShapeDtypeStruct((B_pad, 1), jnp.float32),
        jax.ShapeDtypeStruct((B_pad, H), jnp.float32),
        jax.ShapeDtypeStruct((B_pad, S), jnp.float32),
    )

    grid_spec = pltpu.PrefetchScalarGridSpec(
        num_scalar_prefetch=0,
        grid=(num_v_tiles,),
        in_specs=in_specs,
        out_specs=out_specs,
        scratch_shapes=[pltpu.VMEM((B_pad, 1), jnp.float32),   # running max
                        pltpu.VMEM((B_pad, 1), jnp.float32)],  # running sum(exp)
    )

    logits, lse, state, attn = pl.pallas_call(
        rnn_decoder_kernel,
        out_shape=out_shape,
        grid_spec=grid_spec,
        compiler_params=pltpu.CompilerParams(
            dimension_semantics=("arbitrary",),        # sequential: carries online lse
            vmem_limit_bytes=32 * 1024 * 1024,
        ),
    )(x, keys2d, query,
      params["wq"], params["bq"], wkv, bkv, params["wp"], params["bp"],
      params["wih"], params["bih"], params["whh"], params["bhh"],
      wout, params["bout"])

    # final log_softmax normalization (trivial elementwise pass; lse came from the kernel)
    logp = logits[:B] - lse[:B]
    return logp, state[:B], attn[:B].reshape(B, S, 1)


def reference_forward(input_ids, keys, query, p):
    """Pure-JAX reference reproducing the PyTorch module semantics (f32)."""
    B, S, E = keys.shape
    H = query.shape[1]
    x = p["emb"][input_ids[:, 0]]
    q_proj = query @ p["wq"] + p["bq"]
    k_proj = keys @ p["wk"] + p["bk"]
    v_proj = keys @ p["wv"] + p["bv"]
    score = jnp.tanh(k_proj + q_proj[:, None, :])
    logits = jnp.sum(score * p["wp"], axis=-1, keepdims=True) + p["bp"]
    aw = jax.nn.softmax(logits, axis=1)
    context = jnp.sum(aw * v_proj, axis=1)
    gi = x @ p["wih"] + p["bih"]
    gh = context @ p["whh"] + p["bhh"]
    r = jax.nn.sigmoid(gi[:, :H] + gh[:, :H])
    z = jax.nn.sigmoid(gi[:, H:2 * H] + gh[:, H:2 * H])
    n = jnp.tanh(gi[:, 2 * H:] + r * gh[:, 2 * H:])
    h_new = (1.0 - z) * n + z * context
    out_logits = h_new @ p["wout"] + p["bout"]
    logp = jax.nn.log_softmax(out_logits, axis=-1)
    return logp, h_new, aw


def make_params(key, hidden_dim, embedding_size, vocab_size):
    H, E, V = hidden_dim, embedding_size, vocab_size
    ks = jax.random.split(key, 12)

    def w(k, shape):
        return jax.random.normal(k, shape, dtype=jnp.float32) * 0.1

    return {
        "emb":  w(ks[0], (V, E)),
        # attention (weights stored as (in, out))
        "wq":   w(ks[1], (H, H)), "bq": w(ks[2], (1, H)),
        "wk":   w(ks[3], (E, H)), "bk": w(ks[4], (1, H)),
        "wv":   w(ks[5], (E, H)), "bv": w(ks[6], (1, H)),
        "wp":   w(ks[7], (1, H)), "bp": jnp.full((1, 1), 0.01, jnp.float32),
        # GRU (PyTorch gate order r,z,n), stored as (in, 3H)
        "wih":  w(ks[8], (E, 3 * H)), "bih": w(ks[9], (1, 3 * H)),
        "whh":  w(ks[10], (H, 3 * H)), "bhh": jnp.zeros((1, 3 * H), jnp.float32),
        # output projection
        "wout": w(ks[11], (H, V)), "bout": jnp.zeros((1, V), jnp.float32),
    }


if __name__ == "__main__":
    B, S, E, H, V = 2, 8, 32, 32, 256   # V=256 with tile_v=128 exercises the vocab grid

    key = jax.random.PRNGKey(0)
    pkey, k1, k2, k3 = jax.random.split(key, 4)
    params = make_params(pkey, hidden_dim=H, embedding_size=E, vocab_size=V)

    input_ids = jax.random.randint(k1, (B, 1), 0, V, dtype=jnp.int32)   # decoder input tokens
    keys = jax.random.normal(k2, (B, S, E), dtype=jnp.float32)          # encoder outputs
    query = jax.random.normal(k3, (B, H), dtype=jnp.float32)            # previous hidden state

    logp, state, attn = rnn_decoder_forward(input_ids, keys, query, params, tile_v=128)
    jax.block_until_ready((logp, state, attn))

    ref_logp, ref_state, ref_attn = reference_forward(input_ids, keys, query, params)
    # tolerances account for bf16 MXU operands (f32 accumulation) in the kernel
    np.testing.assert_allclose(np.asarray(logp), np.asarray(ref_logp), rtol=1e-2, atol=1e-2)
    np.testing.assert_allclose(np.asarray(state), np.asarray(ref_state), rtol=1e-2, atol=1e-2)
    np.testing.assert_allclose(np.asarray(attn), np.asarray(ref_attn), rtol=1e-2, atol=1e-2)

    assert logp.shape == (B, V) and state.shape == (B, H) and attn.shape == (B, S, 1)
    print("KERNEL_OK")
</pallas_src>

<mosaic_0001>
module attributes {stable_mosaic.version = 11 : i64} {
  func.func @rnn_decoder_kernel(%arg0: i32, %arg1: memref<8x32xf32, #tpu.memory_space<vmem>>, %arg2: memref<64x32xf32, #tpu.memory_space<vmem>>, %arg3: memref<8x32xf32, #tpu.memory_space<vmem>>, %arg4: memref<32x32xf32, #tpu.memory_space<vmem>>, %arg5: memref<1x32xf32, #tpu.memory_space<vmem>>, %arg6: memref<32x64xbf16, #tpu.memory_space<vmem>>, %arg7: memref<1x64xf32, #tpu.memory_space<vmem>>, %arg8: memref<1x32xf32, #tpu.memory_space<vmem>>, %arg9: memref<1x1xf32, #tpu.memory_space<vmem>>, %arg10: memref<32x96xf32, #tpu.memory_space<vmem>>, %arg11: memref<1x96xf32, #tpu.memory_space<vmem>>, %arg12: memref<32x96xf32, #tpu.memory_space<vmem>>, %arg13: memref<1x96xf32, #tpu.memory_space<vmem>>, %arg14: memref<32x128xbf16, #tpu.memory_space<vmem>>, %arg15: memref<1x128xf32, #tpu.memory_space<vmem>>, %arg16: memref<8x128xf32, #tpu.memory_space<vmem>>, %arg17: memref<8x1xf32, #tpu.memory_space<vmem>>, %arg18: memref<8x32xf32, #tpu.memory_space<vmem>>, %arg19: memref<8x8xf32, #tpu.memory_space<vmem>>, %arg20: memref<8x1xf32, #tpu.memory_space<vmem>>, %arg21: memref<8x1xf32, #tpu.memory_space<vmem>>) attributes {dimension_semantics = [#tpu.dimension_semantics<arbitrary>], iteration_bounds = array<i64: 2>, scalar_prefetch = 0 : i64, scratch_operands = 2 : i64, tpu.core_type = #tpu.core_type<tc>, window_params = [{pipeline_mode = #tpu.pipeline_mode<synchronous>, transform_indices = @transform_0, window_bounds = array<i64: 8, 32>}, {pipeline_mode = #tpu.pipeline_mode<synchronous>, transform_indices = @transform_1, window_bounds = array<i64: 64, 32>}, {pipeline_mode = #tpu.pipeline_mode<synchronous>, transform_indices = @transform_2, window_bounds = array<i64: 8, 32>}, {pipeline_mode = #tpu.pipeline_mode<synchronous>, transform_indices = @transform_3, window_bounds = array<i64: 32, 32>}, {pipeline_mode = #tpu.pipeline_mode<synchronous>, transform_indices = @transform_4, window_bounds = array<i64: 1, 32>}, {pipeline_mode = #tpu.pipeline_mode<synchronous>, transform_indices = @transform_5, window_bounds = array<i64: 32, 64>}, {pipeline_mode = #tpu.pipeline_mode<synchronous>, transform_indices = @transform_6, window_bounds = array<i64: 1, 64>}, {pipeline_mode = #tpu.pipeline_mode<synchronous>, transform_indices = @transform_7, window_bounds = array<i64: 1, 32>}, {pipeline_mode = #tpu.pipeline_mode<synchronous>, transform_indices = @transform_8, window_bounds = array<i64: 1, 1>}, {pipeline_mode = #tpu.pipeline_mode<synchronous>, transform_indices = @transform_9, window_bounds = array<i64: 32, 96>}, {pipeline_mode = #tpu.pipeline_mode<synchronous>, transform_indices = @transform_10, window_bounds = array<i64: 1, 96>}, {pipeline_mode = #tpu.pipeline_mode<synchronous>, transform_indices = @transform_11, window_bounds = array<i64: 32, 96>}, {pipeline_mode = #tpu.pipeline_mode<synchronous>, transform_indices = @transform_12, window_bounds = array<i64: 1, 96>}, {transform_indices = @transform_13, window_bounds = array<i64: 32, 128>}, {transform_indices = @transform_14, window_bounds = array<i64: 1, 128>}, {transform_indices = @transform_15, window_bounds = array<i64: 8, 128>}, {pipeline_mode = #tpu.pipeline_mode<synchronous>, transform_indices = @transform_16, window_bounds = array<i64: 8, 1>}, {pipeline_mode = #tpu.pipeline_mode<synchronous>, transform_indices = @transform_17, window_bounds = array<i64: 8, 32>}, {pipeline_mode = #tpu.pipeline_mode<synchronous>, transform_indices = @transform_18, window_bounds = array<i64: 8, 8>}]} {
    %c0_i32 = arith.constant 0 : i32
    %0 = arith.cmpi eq, %arg0, %c0_i32 : i32
    %1 = arith.extui %0 : i1 to i32
    %c0_i32_0 = arith.constant 0 : i32
    %2 = arith.cmpi ne, %1, %c0_i32_0 : i32
    scf.if %2 {
      %c0_19 = arith.constant 0 : index
      %c0_20 = arith.constant 0 : index
      %30 = vector.load %arg1[%c0_19, %c0_20] : memref<8x32xf32, #tpu.memory_space<vmem>>, vector<8x32xf32>
      %c0_21 = arith.constant 0 : index
      %c0_22 = arith.constant 0 : index
      %31 = vector.load %arg3[%c0_21, %c0_22] : memref<8x32xf32, #tpu.memory_space<vmem>>, vector<8x32xf32>
      %c0_23 = arith.constant 0 : index
      %c0_24 = arith.constant 0 : index
      %32 = vector.load %arg2[%c0_23, %c0_24] : memref<64x32xf32, #tpu.memory_space<vmem>>, vector<64x32xf32>
      %33 = arith.truncf %32 : vector<64x32xf32> to vector<64x32xbf16>
      %c0_25 = arith.constant 0 : index
      %c0_26 = arith.constant 0 : index
      %34 = vector.load %arg6[%c0_25, %c0_26] : memref<32x64xbf16, #tpu.memory_space<vmem>>, vector<32x64xbf16>
      %cst_27 = arith.constant dense<0.000000e+00> : vector<64x64xf32>
      %35 = tpu.matmul %33, %34, %cst_27 {dimension_numbers = #tpu.dot_dimension_numbers<[1], [0], [0], [1], [0, 0, 1, 1], [], []>} : vector<64x32xbf16>, vector<32x64xbf16>, vector<64x64xf32> -> vector<64x64xf32>
      %c0_28 = arith.constant 0 : index
      %c0_29 = arith.constant 0 : index
      %36 = vector.load %arg7[%c0_28, %c0_29] : memref<1x64xf32, #tpu.memory_space<vmem>>, vector<1x64xf32>
      %37 = vector.broadcast %36 : vector<1x64xf32> to vector<64x64xf32>
      %38 = arith.addf %35, %37 : vector<64x64xf32>
      %39 = vector.extract_strided_slice %38 {offsets = [0, 0], sizes = [64, 32], strides = [1, 1]} : vector<64x64xf32> to vector<64x32xf32>
      %40 = vector.shape_cast %39 : vector<64x32xf32> to vector<8x8x32xf32>
      %41 = vector.extract_strided_slice %38 {offsets = [0, 32], sizes = [64, 32], strides = [1, 1]} : vector<64x64xf32> to vector<64x32xf32>
      %42 = vector.shape_cast %41 : vector<64x32xf32> to vector<8x8x32xf32>
      %c0_30 = arith.constant 0 : index
      %c0_31 = arith.constant 0 : index
      %43 = vector.load %arg4[%c0_30, %c0_31] : memref<32x32xf32, #tpu.memory_space<vmem>>, vector<32x32xf32>
      %cst_32 = arith.constant dense<0.000000e+00> : vector<8x32xf32>
      %44 = tpu.matmul %31, %43, %cst_32 {dimension_numbers = #tpu.dot_dimension_numbers<[1], [0], [0], [1], [0, 0, 1, 1], [], []>} : vector<8x32xf32>, vector<32x32xf32>, vector<8x32xf32> -> vector<8x32xf32>
      %c0_33 = arith.constant 0 : index
      %c0_34 = arith.constant 0 : index
      %45 = vector.load %arg5[%c0_33, %c0_34] : memref<1x32xf32, #tpu.memory_space<vmem>>, vector<1x32xf32>
      %46 = vector.broadcast %45 : vector<1x32xf32> to vector<8x32xf32>
      %47 = arith.addf %44, %46 : vector<8x32xf32>
      %48 = vector.shape_cast %47 : vector<8x32xf32> to vector<8x1x32xf32>
      %49 = vector.broadcast %48 : vector<8x1x32xf32> to vector<8x8x32xf32>
      %50 = arith.addf %40, %49 : vector<8x8x32xf32>
      %51 = math.tanh %50 : vector<8x8x32xf32>
      %c0_35 = arith.constant 0 : index
      %c0_36 = arith.constant 0 : index
      %52 = vector.load %arg8[%c0_35, %c0_36] : memref<1x32xf32, #tpu.memory_space<vmem>>, vector<1x32xf32>
      %53 = vector.shape_cast %52 : vector<1x32xf32> to vector<1x1x32xf32>
      %54 = vector.broadcast %53 : vector<1x1x32xf32> to vector<8x8x32xf32>
      %55 = arith.mulf %51, %54 : vector<8x8x32xf32>
      %cst_37 = arith.constant dense<0.000000e+00> : vector<8x8xf32>
      %56 = vector.multi_reduction <add>, %55, %cst_37 [2] : vector<8x8x32xf32> to vector<8x8xf32>
      %c0_38 = arith.constant 0 : index
      %c0_39 = arith.constant 0 : index
      %57 = vector.load %arg9[%c0_38, %c0_39] : memref<1x1xf32, #tpu.memory_space<vmem>>, vector<1x1xf32>
      %58 = vector.broadcast %57 : vector<1x1xf32> to vector<8x8xf32>
      %59 = arith.addf %56, %58 : vector<8x8xf32>
      %cst_40 = arith.constant dense<0xFF800000> : vector<8xf32>
      %60 = vector.multi_reduction <maximumf>, %59, %cst_40 [1] : vector<8x8xf32> to vector<8xf32>
      %61 = vector.shape_cast %60 : vector<8xf32> to vector<8x1xf32>
      %62 = vector.broadcast %61 : vector<8x1xf32> to vector<8x8xf32>
      %63 = arith.subf %59, %62 : vector<8x8xf32>
      %64 = math.exp %63 : vector<8x8xf32>
      %cst_41 = arith.constant dense<0.000000e+00> : vector<8xf32>
      %65 = vector.multi_reduction <add>, %64, %cst_41 [1] : vector<8x8xf32> to vector<8xf32>
      %66 = vector.shape_cast %65 : vector<8xf32> to vector<8x1xf32>
      %67 = vector.broadcast %66 : vector<8x1xf32> to vector<8x8xf32>
      %68 = arith.divf %64, %67 : vector<8x8xf32>
      %69 = vector.shape_cast %68 : vector<8x8xf32> to vector<8x8x1xf32>
      %70 = vector.broadcast %69 : vector<8x8x1xf32> to vector<8x8x32xf32>
      %71 = arith.mulf %70, %42 : vector<8x8x32xf32>
      %cst_42 = arith.constant dense<0.000000e+00> : vector<8x32xf32>
      %72 = vector.multi_reduction <add>, %71, %cst_42 [1] : vector<8x8x32xf32> to vector<8x32xf32>
      %c0_43 = arith.constant 0 : index
      %c0_44 = arith.constant 0 : index
      %73 = vector.load %arg10[%c0_43, %c0_44] : memref<32x96xf32, #tpu.memory_space<vmem>>, vector<32x96xf32>
      %cst_45 = arith.constant dense<0.000000e+00> : vector<8x96xf32>
      %74 = tpu.matmul %30, %73, %cst_45 {dimension_numbers = #tpu.dot_dimension_numbers<[1], [0], [0], [1], [0, 0, 1, 1], [], []>} : vector<8x32xf32>, vector<32x96xf32>, vector<8x96xf32> -> vector<8x96xf32>
      %c0_46 = arith.constant 0 : index
      %c0_47 = arith.constant 0 : index
      %75 = vector.load %arg11[%c0_46, %c0_47] : memref<1x96xf32, #tpu.memory_space<vmem>>, vector<1x96xf32>
      %76 = vector.broadcast %75 : vector<1x96xf32> to vector<8x96xf32>
      %77 = arith.addf %74, %76 : vector<8x96xf32>
      %c0_48 = arith.constant 0 : index
      %c0_49 = arith.constant 0 : index
      %78 = vector.load %arg12[%c0_48, %c0_49] : memref<32x96xf32, #tpu.memory_space<vmem>>, vector<32x96xf32>
      %cst_50 = arith.constant dense<0.000000e+00> : vector<8x96xf32>
      %79 = tpu.matmul %72, %78, %cst_50 {dimension_numbers = #tpu.dot_dimension_numbers<[1], [0], [0], [1], [0, 0, 1, 1], [], []>} : vector<8x32xf32>, vector<32x96xf32>, vector<8x96xf32> -> vector<8x96xf32>
      %c0_51 = arith.constant 0 : index
      %c0_52 = arith.constant 0 : index
      %80 = vector.load %arg13[%c0_51, %c0_52] : memref<1x96xf32, #tpu.memory_space<vmem>>, vector<1x96xf32>
      %81 = vector.broadcast %80 : vector<1x96xf32> to vector<8x96xf32>
      %82 = arith.addf %79, %81 : vector<8x96xf32>
      %83 = vector.extract_strided_slice %77 {offsets = [0, 0], sizes = [8, 32], strides = [1, 1]} : vector<8x96xf32> to vector<8x32xf32>
      %84 = vector.extract_strided_slice %82 {offsets = [0, 0], sizes = [8, 32], strides = [1, 1]} : vector<8x96xf32> to vector<8x32xf32>
      %85 = arith.addf %83, %84 : vector<8x32xf32>
      %86 = arith.negf %85 : vector<8x32xf32>
      %87 = math.exp %86 : vector<8x32xf32>
      %cst_53 = arith.constant 1.000000e+00 : f32
      %88 = vector.broadcast %cst_53 : f32 to vector<8x32xf32>
      %89 = arith.addf %88, %87 : vector<8x32xf32>
      %90 = arith.divf %88, %89 : vector<8x32xf32>
      %91 = vector.extract_strided_slice %77 {offsets = [0, 32], sizes = [8, 32], strides = [1, 1]} : vector<8x96xf32> to vector<8x32xf32>
      %92 = vector.extract_strided_slice %82 {offsets = [0, 32], sizes = [8, 32], strides = [1, 1]} : vector<8x96xf32> to vector<8x32xf32>
      %93 = arith.addf %91, %92 : vector<8x32xf32>
      %94 = arith.negf %93 : vector<8x32xf32>
      %95 = math.exp %94 : vector<8x32xf32>
      %cst_54 = arith.constant 1.000000e+00 : f32
      %96 = vector.broadcast %cst_54 : f32 to vector<8x32xf32>
      %97 = arith.addf %96, %95 : vector<8x32xf32>
      %98 = arith.divf %96, %97 : vector<8x32xf32>
      %99 = vector.extract_strided_slice %77 {offsets = [0, 64], sizes = [8, 32], strides = [1, 1]} : vector<8x96xf32> to vector<8x32xf32>
      %100 = vector.extract_strided_slice %82 {offsets = [0, 64], sizes = [8, 32], strides = [1, 1]} : vector<8x96xf32> to vector<8x32xf32>
      %101 = arith.mulf %90, %100 : vector<8x32xf32>
      %102 = arith.addf %99, %101 : vector<8x32xf32>
      %103 = math.tanh %102 : vector<8x32xf32>
      %cst_55 = arith.constant 1.000000e+00 : f32
      %104 = vector.broadcast %cst_55 : f32 to vector<8x32xf32>
      %105 = arith.subf %104, %98 : vector<8x32xf32>
      %106 = arith.mulf %105, %103 : vector<8x32xf32>
      %107 = arith.mulf %98, %72 : vector<8x32xf32>
      %108 = arith.addf %106, %107 : vector<8x32xf32>
      %c0_56 = arith.constant 0 : index
      %c0_57 = arith.constant 0 : index
      %109 = vector.load %arg18[%c0_56, %c0_57] : memref<8x32xf32, #tpu.memory_space<vmem>>, vector<8x32xf32>
      tpu.vector_store %arg18[%c0_56, %c0_57], %108 {strides = array<i32>} : memref<8x32xf32, #tpu.memory_space<vmem>>, vector<8x32xf32>,
      %c0_58 = arith.constant 0 : index
      %c0_59 = arith.constant 0 : index
      %110 = vector.load %arg19[%c0_58, %c0_59] : memref<8x8xf32, #tpu.memory_space<vmem>>, vector<8x8xf32>
      tpu.vector_store %arg19[%c0_58, %c0_59], %68 {strides = array<i32>} : memref<8x8xf32, #tpu.memory_space<vmem>>, vector<8x8xf32>,
      %cst_60 = arith.constant 0xFF800000 : f32
      %111 = vector.broadcast %cst_60 : f32 to vector<8x1xf32>
      %c0_61 = arith.constant 0 : index
      %c0_62 = arith.constant 0 : index
      %112 = vector.load %arg20[%c0_61, %c0_62] : memref<8x1xf32, #tpu.memory_space<vmem>>, vector<8x1xf32>
      tpu.vector_store %arg20[%c0_61, %c0_62], %111 {strides = array<i32>} : memref<8x1xf32, #tpu.memory_space<vmem>>, vector<8x1xf32>,
      %cst_63 = arith.constant 0.000000e+00 : f32
      %113 = vector.broadcast %cst_63 : f32 to vector<8x1xf32>
      %c0_64 = arith.constant 0 : index
      %c0_65 = arith.constant 0 : index
      %114 = vector.load %arg21[%c0_64, %c0_65] : memref<8x1xf32, #tpu.memory_space<vmem>>, vector<8x1xf32>
      tpu.vector_store %arg21[%c0_64, %c0_65], %113 {strides = array<i32>} : memref<8x1xf32, #tpu.memory_space<vmem>>, vector<8x1xf32>,
    } else {
    }
    %c0 = arith.constant 0 : index
    %c0_1 = arith.constant 0 : index
    %3 = vector.load %arg18[%c0, %c0_1] : memref<8x32xf32, #tpu.memory_space<vmem>>, vector<8x32xf32>
    %4 = arith.truncf %3 : vector<8x32xf32> to vector<8x32xbf16>
    %c0_2 = arith.constant 0 : index
    %c0_3 = arith.constant 0 : index
    %5 = vector.load %arg14[%c0_2, %c0_3] : memref<32x128xbf16, #tpu.memory_space<vmem>>, vector<32x128xbf16>
    %cst = arith.constant dense<0.000000e+00> : vector<8x128xf32>
    %6 = tpu.matmul %4, %5, %cst {dimension_numbers = #tpu.dot_dimension_numbers<[1], [0], [0], [1], [0, 0, 1, 1], [], []>} : vector<8x32xbf16>, vector<32x128xbf16>, vector<8x128xf32> -> vector<8x128xf32>
    %c0_4 = arith.constant 0 : index
    %c0_5 = arith.constant 0 : index
    %7 = vector.load %arg15[%c0_4, %c0_5] : memref<1x128xf32, #tpu.memory_space<vmem>>, vector<1x128xf32>
    %8 = vector.broadcast %7 : vector<1x128xf32> to vector<8x128xf32>
    %9 = arith.addf %6, %8 : vector<8x128xf32>
    %c0_6 = arith.constant 0 : index
    %c0_7 = arith.constant 0 : index
    %10 = vector.load %arg16[%c0_6, %c0_7] : memref<8x128xf32, #tpu.memory_space<vmem>>, vector<8x128xf32>
    tpu.vector_store %arg16[%c0_6, %c0_7], %9 {strides = array<i32>} : memref<8x128xf32, #tpu.memory_space<vmem>>, vector<8x128xf32>,
    %cst_8 = arith.constant dense<0xFF800000> : vector<8xf32>
    %11 = vector.multi_reduction <maximumf>, %9, %cst_8 [1] : vector<8x128xf32> to vector<8xf32>
    %12 = vector.shape_cast %11 : vector<8xf32> to vector<8x1xf32>
    %c0_9 = arith.constant 0 : index
    %c0_10 = arith.constant 0 : index
    %13 = vector.load %arg20[%c0_9, %c0_10] : memref<8x1xf32, #tpu.memory_space<vmem>>, vector<8x1xf32>
    %14 = arith.maximumf %13, %12 : vector<8x1xf32>
    %c0_11 = arith.constant 0 : index
    %c0_12 = arith.constant 0 : index
    %15 = vector.load %arg21[%c0_11, %c0_12] : memref<8x1xf32, #tpu.memory_space<vmem>>, vector<8x1xf32>
    %16 = arith.subf %13, %14 : vector<8x1xf32>
    %17 = math.exp %16 : vector<8x1xf32>
    %18 = arith.mulf %15, %17 : vector<8x1xf32>
    %19 = vector.broadcast %14 : vector<8x1xf32> to vector<8x128xf32>
    %20 = arith.subf %9, %19 : vector<8x128xf32>
    %21 = math.exp %20 : vector<8x128xf32>
    %cst_13 = arith.constant dense<0.000000e+00> : vector<8xf32>
    %22 = vector.multi_reduction <add>, %21, %cst_13 [1] : vector<8x128xf32> to vector<8xf32>
    %23 = vector.shape_cast %22 : vector<8xf32> to vector<8x1xf32>
    %24 = arith.addf %18, %23 : vector<8x1xf32>
    %c0_14 = arith.constant 0 : index
    %c0_15 = arith.constant 0 : index
    %25 = vector.load %arg21[%c0_14, %c0_15] : memref<8x1xf32, #tpu.memory_space<vmem>>, vector<8x1xf32>
    tpu.vector_store %arg21[%c0_14, %c0_15], %24 {strides = array<i32>} : memref<8x1xf32, #tpu.memory_space<vmem>>, vector<8x1xf32>,
    %c0_16 = arith.constant 0 : index
    %c0_17 = arith.constant 0 : index
    %26 = vector.load %arg20[%c0_16, %c0_17] : memref<8x1xf32, #tpu.memory_space<vmem>>, vector<8x1xf32>
    tpu.vector_store %arg20[%c0_16, %c0_17], %14 {strides = array<i32>} : memref<8x1xf32, #tpu.memory_space<vmem>>, vector<8x1xf32>,
    %c1_i32 = arith.constant 1 : i32
    %27 = arith.cmpi eq, %arg0, %c1_i32 : i32
    %28 = arith.extui %27 : i1 to i32
    %c0_i32_18 = arith.constant 0 : i32
    %29 = arith.cmpi ne, %28, %c0_i32_18 : i32
    scf.if %29 {
      %c0_19 = arith.constant 0 : index
      %c0_20 = arith.constant 0 : index
      %30 = vector.load %arg20[%c0_19, %c0_20] : memref<8x1xf32, #tpu.memory_space<vmem>>, vector<8x1xf32>
      %c0_21 = arith.constant 0 : index
      %c0_22 = arith.constant 0 : index
      %31 = vector.load %arg21[%c0_21, %c0_22] : memref<8x1xf32, #tpu.memory_space<vmem>>, vector<8x1xf32>
      %32 = math.log %31 : vector<8x1xf32>
      %33 = arith.addf %30, %32 : vector<8x1xf32>
      %c0_23 = arith.constant 0 : index
      %c0_24 = arith.constant 0 : index
      %34 = vector.load %arg17[%c0_23, %c0_24] : memref<8x1xf32, #tpu.memory_space<vmem>>, vector<8x1xf32>
      tpu.vector_store %arg17[%c0_23, %c0_24], %33 {strides = array<i32>} : memref<8x1xf32, #tpu.memory_space<vmem>>, vector<8x1xf32>,
    } else {
    }
    return
  }
  func.func @transform_0(%arg0: i32) -> (i32, i32) {
    %c0_i32 = arith.constant 0 : i32
    %c0_i32_0 = arith.constant 0 : i32
    %c0_i32_1 = arith.constant 0 : i32
    return %c0_i32, %c0_i32_0 : i32, i32
  }
  func.func @transform_1(%arg0: i32) -> (i32, i32) {
    %c0_i32 = arith.constant 0 : i32
    %c0_i32_0 = arith.constant 0 : i32
    %c0_i32_1 = arith.constant 0 : i32
    return %c0_i32, %c0_i32_0 : i32, i32
  }
  func.func @transform_2(%arg0: i32) -> (i32, i32) {
    %c0_i32 = arith.constant 0 : i32
    %c0_i32_0 = arith.constant 0 : i32
    %c0_i32_1 = arith.constant 0 : i32
    return %c0_i32, %c0_i32_0 : i32, i32
  }
  func.func @transform_3(%arg0: i32) -> (i32, i32) {
    %c0_i32 = arith.constant 0 : i32
    %c0_i32_0 = arith.constant 0 : i32
    %c0_i32_1 = arith.constant 0 : i32
    return %c0_i32, %c0_i32_0 : i32, i32
  }
  func.func @transform_4(%arg0: i32) -> (i32, i32) {
    %c0_i32 = arith.constant 0 : i32
    %c0_i32_0 = arith.constant 0 : i32
    %c0_i32_1 = arith.constant 0 : i32
    return %c0_i32, %c0_i32_0 : i32, i32
  }
  func.func @transform_5(%arg0: i32) -> (i32, i32) {
    %c0_i32 = arith.constant 0 : i32
    %c0_i32_0 = arith.constant 0 : i32
    %c0_i32_1 = arith.constant 0 : i32
    return %c0_i32, %c0_i32_0 : i32, i32
  }
  func.func @transform_6(%arg0: i32) -> (i32, i32) {
    %c0_i32 = arith.constant 0 : i32
    %c0_i32_0 = arith.constant 0 : i32
    %c0_i32_1 = arith.constant 0 : i32
    return %c0_i32, %c0_i32_0 : i32, i32
  }
  func.func @transform_7(%arg0: i32) -> (i32, i32) {
    %c0_i32 = arith.constant 0 : i32
    %c0_i32_0 = arith.constant 0 : i32
    %c0_i32_1 = arith.constant 0 : i32
    return %c0_i32, %c0_i32_0 : i32, i32
  }
  func.func @transform_8(%arg0: i32) -> (i32, i32) {
    %c0_i32 = arith.constant 0 : i32
    %c0_i32_0 = arith.constant 0 : i32
    %c0_i32_1 = arith.constant 0 : i32
    return %c0_i32, %c0_i32_0 : i32, i32
  }
  func.func @transform_9(%arg0: i32) -> (i32, i32) {
    %c0_i32 = arith.constant 0 : i32
    %c0_i32_0 = arith.constant 0 : i32
    %c0_i32_1 = arith.constant 0 : i32
    return %c0_i32, %c0_i32_0 : i32, i32
  }
  func.func @transform_10(%arg0: i32) -> (i32, i32) {
    %c0_i32 = arith.constant 0 : i32
    %c0_i32_0 = arith.constant 0 : i32
    %c0_i32_1 = arith.constant 0 : i32
    return %c0_i32, %c0_i32_0 : i32, i32
  }
  func.func @transform_11(%arg0: i32) -> (i32, i32) {
    %c0_i32 = arith.constant 0 : i32
    %c0_i32_0 = arith.constant 0 : i32
    %c0_i32_1 = arith.constant 0 : i32
    return %c0_i32, %c0_i32_0 : i32, i32
  }
  func.func @transform_12(%arg0: i32) -> (i32, i32) {
    %c0_i32 = arith.constant 0 : i32
    %c0_i32_0 = arith.constant 0 : i32
    %c0_i32_1 = arith.constant 0 : i32
    return %c0_i32, %c0_i32_0 : i32, i32
  }
  func.func @transform_13(%arg0: i32) -> (i32, i32) {
    %c0_i32 = arith.constant 0 : i32
    %c0_i32_0 = arith.constant 0 : i32
    return %c0_i32, %arg0 : i32, i32
  }
  func.func @transform_14(%arg0: i32) -> (i32, i32) {
    %c0_i32 = arith.constant 0 : i32
    %c0_i32_0 = arith.constant 0 : i32
    return %c0_i32, %arg0 : i32, i32
  }
  func.func @transform_15(%arg0: i32) -> (i32, i32) {
    %c0_i32 = arith.constant 0 : i32
    %c0_i32_0 = arith.constant 0 : i32
    return %c0_i32, %arg0 : i32, i32
  }
  func.func @transform_16(%arg0: i32) -> (i32, i32) {
    %c0_i32 = arith.constant 0 : i32
    %c0_i32_0 = arith.constant 0 : i32
    %c0_i32_1 = arith.constant 0 : i32
    return %c0_i32, %c0_i32_0 : i32, i32
  }
  func.func @transform_17(%arg0: i32) -> (i32, i32) {
    %c0_i32 = arith.constant 0 : i32
    %c0_i32_0 = arith.constant 0 : i32
    %c0_i32_1 = arith.constant 0 : i32
    return %c0_i32, %c0_i32_0 : i32, i32
  }
  func.func @transform_18(%arg0: i32) -> (i32, i32) {
    %c0_i32 = arith.constant 0 : i32
    %c0_i32_0 = arith.constant 0 : i32
    %c0_i32_1 = arith.constant 0 : i32
    return %c0_i32, %c0_i32_0 : i32, i32
  }
}

</mosaic_0001>

<llo_original>
// kernel: tpu_custom_call.1
$region0: #{tpu_custom_call.1}
  #allocation0 [shape = 'u32[]', space=smem, size = 0x4, offset = 0x4, fixed_abs, tag = 'smem constant byte address 0x4 - core index']
  #allocation1 [shape = 'u32[72,128]{1,0:T(1,128)}', space=vmem, size = 0x9000, scoped, tag = 'internal scratch']
  #allocation2 [shape = 'f32[8,1]{1,0:T(8,128)}', space=vmem, size = 0x1000, scoped, tag = 'scratch operand']
  #allocation3 [shape = 'f32[8,1]{1,0:T(8,128)}', space=vmem, size = 0x1000, scoped, tag = 'scratch operand']
  #allocation4 [shape = 'f32[1,1]{1,0:T(1,128)S(1)}', space=vmem, size = 0x200, scoped, tag = 'scoped memory for tpu_custom_call.1']
  %s0 = inlined_call_operand.hbm [shape: f32[8,32], index: 0, kind: input, shape index: {}]
  %s1 = inlined_call_operand.vmem [shape: f32[64,32], index: 1, kind: input, shape index: {}]
  %s2 = inlined_call_operand.hbm [shape: f32[8,32], index: 2, kind: input, shape index: {}]
  %s3 = inlined_call_operand.vmem [shape: f32[32,32], index: 3, kind: input, shape index: {}]
  %s4 = inlined_call_operand.vmem [shape: f32[1,32], index: 4, kind: input, shape index: {}]
  %s5 = inlined_call_operand.hbm [shape: bf16[32,64], index: 5, kind: input, shape index: {}]
  %s6 = inlined_call_operand.vmem [shape: f32[1,64], index: 6, kind: input, shape index: {}]
  %s7 = inlined_call_operand.vmem [shape: f32[1,32], index: 7, kind: input, shape index: {}]
  %s8 = inlined_call_operand.<no memory space> [shape: f32[1,1], index: 8, kind: input, shape index: {}]
  %s9 = inlined_call_operand.vmem [shape: f32[32,96], index: 9, kind: input, shape index: {}]
  %s10 = inlined_call_operand.vmem [shape: f32[1,96], index: 10, kind: input, shape index: {}]
  %s11 = inlined_call_operand.vmem [shape: f32[32,96], index: 11, kind: input, shape index: {}]
  %s12 = inlined_call_operand.vmem [shape: f32[1,96], index: 12, kind: input, shape index: {}]
  %s13 = inlined_call_operand.hbm [shape: bf16[32,256], index: 13, kind: input, shape index: {}]
  %s14 = inlined_call_operand.vmem [shape: f32[1,256], index: 14, kind: input, shape index: {}]
  %s15 = inlined_call_operand.hbm [shape: f32[8,256], index: 15, kind: output, shape index: {0}]
  %s16 = inlined_call_operand.vmem [shape: f32[8,1], index: 16, kind: output, shape index: {1}]
  %s17 = inlined_call_operand.hbm [shape: f32[8,32], index: 17, kind: output, shape index: {2}]
  %s18 = inlined_call_operand.hbm [shape: f32[8,8], index: 18, kind: output, shape index: {3}]
  %19 = xla_tuple %s15, %s16, %s17, %s18
  %s20 = sld [smem:[#allocation0]]
  $region141: #{tpu_custom_call.1} parent=0
    _
  %s22 = ssub.s32 1, %s20
  %s23 = scalar_select 0, %s22, %s20
  %v24 = vstv %s8
  %25 = vst [vmem:[#allocation4] sm:$0x1] %v24
  $region1: #{tpu_custom_call.1} parent=0
    #allocation5 [shape = 'u8[4096]{0}', space=vmem, size = 0x1000, scoped, tag = 'input window, operand 0, single buffered']
    #allocation6 [shape = 's32[2]{0}', space=sflag, size = 0x8, scoped, tag = 'scoped memory for tpu_custom_call.1']
    #allocation7 [shape = 's32[2]{0}', space=sflag, size = 0x8, scoped, tag = 'scoped memory for tpu_custom_call.1']
    #allocation8 [shape = 'u8[4096]{0}', space=vmem, size = 0x1000, scoped, tag = 'input window, operand 2, single buffered']
    #allocation9 [shape = 's32[1]{0}', space=sflag, size = 0x4, scoped, tag = 'scoped memory for tpu_custom_call.1']
    #allocation10 [shape = 'u8[8192]{0}', space=vmem, size = 0x2000, scoped, tag = 'input window, operand 5, single buffered']
    #allocation11 [shape = 'u8[16384]{0}', space=vmem, size = 0x4000, scoped, tag = 'input window, operand 13']
    #allocation12 [shape = 's32[2]{0}', space=sflag, size = 0x8, scoped, tag = 'scoped memory for tpu_custom_call.1']
    #allocation13 [shape = 'u8[8192]{0}', space=vmem, size = 0x2000, scoped, tag = 'output window, operand 0']
    #allocation14 [shape = 'u8[4096]{0}', space=vmem, size = 0x1000, scoped, tag = 'output window, operand 2, single buffered']
    #allocation15 [shape = 's32[1]{0}', space=sflag, size = 0x4, scoped, tag = 'scoped memory for tpu_custom_call.1']
    #allocation16 [shape = 'u8[4096]{0}', space=vmem, size = 0x1000, scoped, tag = 'output window, operand 3, single buffered']
    %26 = vsyncpa [#allocation6], 0
    %27 = vsyncpa [#allocation9], 0
    %28 = vsyncpa [#allocation12], 0
    %s29 = scalar_lea.sflag [#allocation12], 1
    %30 = vsyncpa %s29, 0
    %31 = vsyncpa [#allocation7], 0
    %s32 = scalar_lea.sflag [#allocation7], 1
    %33 = vsyncpa %s32, 0
    %34 = vsyncpa [#allocation15], 0
    loop: start=0, step=1, limit=4
    $region2: #{tpu_custom_call.1} parent=1 // loop_pre_header
      _
    $region3: #{tpu_custom_call.1} parent=1 // loop_header
      %s36 = sphi 0, %s40
      %p37 = scmp.ge.s32.totalorder %s36, 4
      %s44 = sphi 0, %s44
      %s46 = sphi 0, %s44
      %s47 = sphi 0, %s46
      %s61 = sphi 0, %s47
      %s65 = sphi 0, %s65
      %s67 = sphi 0, %s65
      %s68 = sphi 0, %s67
      %s82 = sphi 0, %s68
      %s86 = sphi 0, %s86
      %s88 = sphi 0, %s86
      %s89 = sphi 0, %s88
      %s103 = sphi 0, %s89
      %s107 = sphi 0, %s107
      %s109 = sphi 0, %s107
      %s110 = sphi 0, %s109
      %s124 = sphi 0, %s110
      %s128 = sphi 0, %s128
      %s130 = sphi 0, %s128
      %s131 = sphi 0, %s130
      %s145 = sphi 0, %s131
      %s149 = sphi 0, %s149
      %s151 = sphi 0, %s149
      %s152 = sphi 0, %s151
      %s166 = sphi 0, %s152
      %s170 = sphi 0, %s170
      %s172 = sphi 0, %s170
      %s173 = sphi 0, %s172
      %s187 = sphi 0, %s173
      %s191 = sphi 0, %s191
      %s193 = sphi 0, %s191
      %s194 = sphi 0, %s193
      %s208 = sphi 0, %s194
      %s212 = sphi 0, %s212
      %s214 = sphi 0, %s212
      %s215 = sphi 0, %s214
      %s229 = sphi 0, %s215
      %s233 = sphi 0, %s233
      %s235 = sphi 0, %s233
      %s236 = sphi 0, %s235
      %s250 = sphi 0, %s236
      %s254 = sphi 0, %s254
      %s256 = sphi 0, %s254
      %s257 = sphi 0, %s256
      %s271 = sphi 0, %s257
      %s275 = sphi 0, %s275
      %s277 = sphi 0, %s275
      %s278 = sphi 0, %s277
      %s292 = sphi 0, %s278
      %s296 = sphi 0, %s296
      %s298 = sphi 0, %s296
      %s299 = sphi 0, %s298
      %s313 = sphi 0, %s299
      %s319 = sphi 0, %s321
      %s322 = sphi 0, %s319
      %s323 = sphi 0, %s322
      %s339 = sphi 0, %s323
      %s345 = sphi 0, %s347
      %s348 = sphi 0, %s345
      %s349 = sphi 0, %s348
      %s365 = sphi 0, %s349
      %s371 = sphi 0, %s373
      %s374 = sphi 0, %s371
      %s375 = sphi 0, %s374
      %s391 = sphi 0, %s375
      %s395 = sphi 0, %s395
      %s397 = sphi 0, %s395
      %s398 = sphi 0, %s397
      %s412 = sphi 0, %s398
      %s416 = sphi 0, %s416
      %s418 = sphi 0, %s416
      %s419 = sphi 0, %s418
      %s433 = sphi 0, %s419
      %s437 = sphi 0, %s437
      %s439 = sphi 0, %s437
      %s440 = sphi 0, %s439
      %s454 = sphi 0, %s440
    $region4: #{tpu_custom_call.1} parent=1 // loop_header_branch
      %39 = sbr.rel (%p37) target = $region8
    $region5: #{tpu_custom_call.1} parent=1 // loop_body
      %s41 = ssub.s32 %s36, 1
      %s42 = ssub.s32 %s36, 2
      %s43 = sadd.s32 %s36, 1
      %s45 = sadd.s32 %s44, 1
      %p48 = scmp.eq.s32.totalorder %s36, 1
      %p49 = scmp.ne.s32.totalorder %s44, %s46
      %p50 = scmp.eq.s32.totalorder %s36, 0
      %p51 = por %p49, %p50
      %p52 = scmp.ne.s32.totalorder %s44, %s46
      %p53 = scmp.eq.s32.totalorder %s41, 1
      %p54 = por %p52, %p53
      %p55 = scmp.ne.s32.totalorder %s46, %s47
      %p56 = scmp.eq.s32.totalorder %s41, 0
      %p57 = por %p55, %p56
      %p58 = scmp.ne.s32.totalorder %s46, %s47
      %p59 = scmp.eq.s32.totalorder %s42, 1
      %p60 = por %p58, %p59
      %p62 = scmp.ne.s32.totalorder %s47, %s61
      %p63 = scmp.eq.s32.totalorder %s42, 0
      %p64 = por %p62, %p63
      %s66 = sadd.s32 %s65, 1
      %p69 = scmp.eq.s32.totalorder %s36, 1
      %p70 = scmp.ne.s32.totalorder %s65, %s67
      %p71 = scmp.eq.s32.totalorder %s36, 0
      %p72 = por %p70, %p71
      %p73 = scmp.ne.s32.totalorder %s65, %s67
      %p74 = scmp.eq.s32.totalorder %s41, 1
      %p75 = por %p73, %p74
      %p76 = scmp.ne.s32.totalorder %s67, %s68
      %p77 = scmp.eq.s32.totalorder %s41, 0
      %p78 = por %p76, %p77
      %p79 = scmp.ne.s32.totalorder %s67, %s68
      %p80 = scmp.eq.s32.totalorder %s42, 1
      %p81 = por %p79, %p80
      %p83 = scmp.ne.s32.totalorder %s68, %s82
      %p84 = scmp.eq.s32.totalorder %s42, 0
      %p85 = por %p83, %p84
      %s87 = sadd.s32 %s86, 1
      %p90 = scmp.eq.s32.totalorder %s36, 1
      %p91 = scmp.ne.s32.totalorder %s86, %s88
      %p92 = scmp.eq.s32.totalorder %s36, 0
      %p93 = por %p91, %p92
      %p94 = scmp.ne.s32.totalorder %s86, %s88
      %p95 = scmp.eq.s32.totalorder %s41, 1
      %p96 = por %p94, %p95
      %p97 = scmp.ne.s32.totalorder %s88, %s89
      %p98 = scmp.eq.s32.totalorder %s41, 0
      %p99 = por %p97, %p98
      %p100 = scmp.ne.s32.totalorder %s88, %s89
      %p101 = scmp.eq.s32.totalorder %s42, 1
      %p102 = por %p100, %p101
      %p104 = scmp.ne.s32.totalorder %s89, %s103
      %p105 = scmp.eq.s32.totalorder %s42, 0
      %p106 = por %p104, %p105
      %s108 = sadd.s32 %s107, 1
      %p111 = scmp.eq.s32.totalorder %s36, 1
      %p112 = scmp.ne.s32.totalorder %s107, %s109
      %p113 = scmp.eq.s32.totalorder %s36, 0
      %p114 = por %p112, %p113
      %p115 = scmp.ne.s32.totalorder %s107, %s109
      %p116 = scmp.eq.s32.totalorder %s41, 1
      %p117 = por %p115, %p116
      %p118 = scmp.ne.s32.totalorder %s109, %s110
      %p119 = scmp.eq.s32.totalorder %s41, 0
      %p120 = por %p118, %p119
      %p121 = scmp.ne.s32.totalorder %s109, %s110
      %p122 = scmp.eq.s32.totalorder %s42, 1
      %p123 = por %p121, %p122
      %p125 = scmp.ne.s32.totalorder %s110, %s124
      %p126 = scmp.eq.s32.totalorder %s42, 0
      %p127 = por %p125, %p126
      %s129 = sadd.s32 %s128, 1
      %p132 = scmp.eq.s32.totalorder %s36, 1
      %p133 = scmp.ne.s32.totalorder %s128, %s130
      %p134 = scmp.eq.s32.totalorder %s36, 0
      %p135 = por %p133, %p134
      %p136 = scmp.ne.s32.totalorder %s128, %s130
      %p137 = scmp.eq.s32.totalorder %s41, 1
      %p138 = por %p136, %p137
      %p139 = scmp.ne.s32.totalorder %s130, %s131
      %p140 = scmp.eq.s32.totalorder %s41, 0
      %p141 = por %p139, %p140
      %p142 = scmp.ne.s32.totalorder %s130, %s131
      %p143 = scmp.eq.s32.totalorder %s42, 1
      %p144 = por %p142, %p143
      %p146 = scmp.ne.s32.totalorder %s131, %s145
      %p147 = scmp.eq.s32.totalorder %s42, 0
      %p148 = por %p146, %p147
      %s150 = sadd.s32 %s149, 1
      %p153 = scmp.eq.s32.totalorder %s36, 1
      %p154 = scmp.ne.s32.totalorder %s149, %s151
      %p155 = scmp.eq.s32.totalorder %s36, 0
      %p156 = por %p154, %p155
      %p157 = scmp.ne.s32.totalorder %s149, %s151
      %p158 = scmp.eq.s32.totalorder %s41, 1
      %p159 = por %p157, %p158
      %p160 = scmp.ne.s32.totalorder %s151, %s152
      %p161 = scmp.eq.s32.totalorder %s41, 0
      %p162 = por %p160, %p161
      %p163 = scmp.ne.s32.totalorder %s151, %s152
      %p164 = scmp.eq.s32.totalorder %s42, 1
      %p165 = por %p163, %p164
      %p167 = scmp.ne.s32.totalorder %s152, %s166
      %p168 = scmp.eq.s32.totalorder %s42, 0
      %p169 = por %p167, %p168
      %s171 = sadd.s32 %s170, 1
      %p174 = scmp.eq.s32.totalorder %s36, 1
      %p175 = scmp.ne.s32.totalorder %s170, %s172
      %p176 = scmp.eq.s32.totalorder %s36, 0
      %p177 = por %p175, %p176
      %p178 = scmp.ne.s32.totalorder %s170, %s172
      %p179 = scmp.eq.s32.totalorder %s41, 1
      %p180 = por %p178, %p179
      %p181 = scmp.ne.s32.totalorder %s172, %s173
      %p182 = scmp.eq.s32.totalorder %s41, 0
      %p183 = por %p181, %p182
      %p184 = scmp.ne.s32.totalorder %s172, %s173
      %p185 = scmp.eq.s32.totalorder %s42, 1
      %p186 = por %p184, %p185
      %p188 = scmp.ne.s32.totalorder %s173, %s187
      %p189 = scmp.eq.s32.totalorder %s42, 0
      %p190 = por %p188, %p189
      %s192 = sadd.s32 %s191, 1
      %p195 = scmp.eq.s32.totalorder %s36, 1
      %p196 = scmp.ne.s32.totalorder %s191, %s193
      %p197 = scmp.eq.s32.totalorder %s36, 0
      %p198 = por %p196, %p197
      %p199 = scmp.ne.s32.totalorder %s191, %s193
      %p200 = scmp.eq.s32.totalorder %s41, 1
      %p201 = por %p199, %p200
      %p202 = scmp.ne.s32.totalorder %s193, %s194
      %p203 = scmp.eq.s32.totalorder %s41, 0
      %p204 = por %p202, %p203
      %p205 = scmp.ne.s32.totalorder %s193, %s194
      %p206 = scmp.eq.s32.totalorder %s42, 1
      %p207 = por %p205, %p206
      %p209 = scmp.ne.s32.totalorder %s194, %s208
      %p210 = scmp.eq.s32.totalorder %s42, 0
      %p211 = por %p209, %p210
      %s213 = sadd.s32 %s212, 1
      %p216 = scmp.eq.s32.totalorder %s36, 1
      %p217 = scmp.ne.s32.totalorder %s212, %s214
      %p218 = scmp.eq.s32.totalorder %s36, 0
      %p219 = por %p217, %p218
      %p220 = scmp.ne.s32.totalorder %s212, %s214
      %p221 = scmp.eq.s32.totalorder %s41, 1
      %p222 = por %p220, %p221
      %p223 = scmp.ne.s32.totalorder %s214, %s215
      %p224 = scmp.eq.s32.totalorder %s41, 0
      %p225 = por %p223, %p224
      %p226 = scmp.ne.s32.totalorder %s214, %s215
      %p227 = scmp.eq.s32.totalorder %s42, 1
      %p228 = por %p226, %p227
      %p230 = scmp.ne.s32.totalorder %s215, %s229
      %p231 = scmp.eq.s32.totalorder %s42, 0
      %p232 = por %p230, %p231
      %s234 = sadd.s32 %s233, 1
      %p237 = scmp.eq.s32.totalorder %s36, 1
      %p238 = scmp.ne.s32.totalorder %s233, %s235
      %p239 = scmp.eq.s32.totalorder %s36, 0
      %p240 = por %p238, %p239
      %p241 = scmp.ne.s32.totalorder %s233, %s235
      %p242 = scmp.eq.s32.totalorder %s41, 1
      %p243 = por %p241, %p242
      %p244 = scmp.ne.s32.totalorder %s235, %s236
      %p245 = scmp.eq.s32.totalorder %s41, 0
      %p246 = por %p244, %p245
      %p247 = scmp.ne.s32.totalorder %s235, %s236
      %p248 = scmp.eq.s32.totalorder %s42, 1
      %p249 = por %p247, %p248
      %p251 = scmp.ne.s32.totalorder %s236, %s250
      %p252 = scmp.eq.s32.totalorder %s42, 0
      %p253 = por %p251, %p252
      %s255 = sadd.s32 %s254, 1
      %p258 = scmp.eq.s32.totalorder %s36, 1
      %p259 = scmp.ne.s32.totalorder %s254, %s256
      %p260 = scmp.eq.s32.totalorder %s36, 0
      %p261 = por %p259, %p260
      %p262 = scmp.ne.s32.totalorder %s254, %s256
      %p263 = scmp.eq.s32.totalorder %s41, 1
      %p264 = por %p262, %p263
      %p265 = scmp.ne.s32.totalorder %s256, %s257
      %p266 = scmp.eq.s32.totalorder %s41, 0
      %p267 = por %p265, %p266
      %p268 = scmp.ne.s32.totalorder %s256, %s257
      %p269 = scmp.eq.s32.totalorder %s42, 1
      %p270 = por %p268, %p269
      %p272 = scmp.ne.s32.totalorder %s257, %s271
      %p273 = scmp.eq.s32.totalorder %s42, 0
      %p274 = por %p272, %p273
      %s276 = sadd.s32 %s275, 1
      %p279 = scmp.eq.s32.totalorder %s36, 1
      %p280 = scmp.ne.s32.totalorder %s275, %s277
      %p281 = scmp.eq.s32.totalorder %s36, 0
      %p282 = por %p280, %p281
      %p283 = scmp.ne.s32.totalorder %s275, %s277
      %p284 = scmp.eq.s32.totalorder %s41, 1
      %p285 = por %p283, %p284
      %p286 = scmp.ne.s32.totalorder %s277, %s278
      %p287 = scmp.eq.s32.totalorder %s41, 0
      %p288 = por %p286, %p287
      %p289 = scmp.ne.s32.totalorder %s277, %s278
      %p290 = scmp.eq.s32.totalorder %s42, 1
      %p291 = por %p289, %p290
      %p293 = scmp.ne.s32.totalorder %s278, %s292
      %p294 = scmp.eq.s32.totalorder %s42, 0
      %p295 = por %p293, %p294
      %s297 = sadd.s32 %s296, 1
      %p300 = scmp.eq.s32.totalorder %s36, 1
      %p301 = scmp.ne.s32.totalorder %s296, %s298
      %p302 = scmp.eq.s32.totalorder %s36, 0
      %p303 = por %p301, %p302
      %p304 = scmp.ne.s32.totalorder %s296, %s298
      %p305 = scmp.eq.s32.totalorder %s41, 1
      %p306 = por %p304, %p305
      %p307 = scmp.ne.s32.totalorder %s298, %s299
      %p308 = scmp.eq.s32.totalorder %s41, 0
      %p309 = por %p307, %p308
      %p310 = scmp.ne.s32.totalorder %s298, %s299
      %p311 = scmp.eq.s32.totalorder %s42, 1
      %p312 = por %p310, %p311
      %p314 = scmp.ne.s32.totalorder %s299, %s313
      %p315 = scmp.eq.s32.totalorder %s42, 0
      %p316 = por %p314, %p315
      %s317 = ssub.s32 %s36, %s43
      %p318 = scmp.eq.s32.totalorder %s317, 0
      %s320 = sadd.s32 %s319, 1
      %s321 = scalar_select %p318, %s319, %s320
      %p324 = pneg %p318
      %p325 = scmp.eq.s32.totalorder %s36, 1
      %p326 = por %p324, %p325
      %p327 = scmp.ne.s32.totalorder %s319, %s322
      %p328 = scmp.eq.s32.totalorder %s36, 0
      %p329 = por %p327, %p328
      %p330 = scmp.ne.s32.totalorder %s319, %s322
      %p331 = scmp.eq.s32.totalorder %s41, 1
      %p332 = por %p330, %p331
      %p333 = scmp.ne.s32.totalorder %s322, %s323
      %p334 = scmp.eq.s32.totalorder %s41, 0
      %p335 = por %p333, %p334
      %p336 = scmp.ne.s32.totalorder %s322, %s323
      %p337 = scmp.eq.s32.totalorder %s42, 1
      %p338 = por %p336, %p337
      %p340 = scmp.ne.s32.totalorder %s323, %s339
      %p341 = scmp.eq.s32.totalorder %s42, 0
      %p342 = por %p340, %p341
      %s343 = ssub.s32 %s36, %s43
      %p344 = scmp.eq.s32.totalorder %s343, 0
      %s346 = sadd.s32 %s345, 1
      %s347 = scalar_select %p344, %s345, %s346
      %p350 = pneg %p344
      %p351 = scmp.eq.s32.totalorder %s36, 1
      %p352 = por %p350, %p351
      %p353 = scmp.ne.s32.totalorder %s345, %s348
      %p354 = scmp.eq.s32.totalorder %s36, 0
      %p355 = por %p353, %p354
      %p356 = scmp.ne.s32.totalorder %s345, %s348
      %p357 = scmp.eq.s32.totalorder %s41, 1
      %p358 = por %p356, %p357
      %p359 = scmp.ne.s32.totalorder %s348, %s349
      %p360 = scmp.eq.s32.totalorder %s41, 0
      %p361 = por %p359, %p360
      %p362 = scmp.ne.s32.totalorder %s348, %s349
      %p363 = scmp.eq.s32.totalorder %s42, 1
      %p364 = por %p362, %p363
      %p366 = scmp.ne.s32.totalorder %s349, %s365
      %p367 = scmp.eq.s32.totalorder %s42, 0
      %p368 = por %p366, %p367
      %s369 = ssub.s32 %s36, %s43
      %p370 = scmp.eq.s32.totalorder %s369, 0
      %s372 = sadd.s32 %s371, 1
      %s373 = scalar_select %p370, %s371, %s372
      %p376 = pneg %p370
      %p377 = scmp.eq.s32.totalorder %s36, 1
      %p378 = por %p376, %p377
      %p379 = scmp.ne.s32.totalorder %s371, %s374
      %p380 = scmp.eq.s32.totalorder %s36, 0
      %p381 = por %p379, %p380
      %p382 = scmp.ne.s32.totalorder %s371, %s374
      %p383 = scmp.eq.s32.totalorder %s41, 1
      %p384 = por %p382, %p383
      %p385 = scmp.ne.s32.totalorder %s374, %s375
      %p386 = scmp.eq.s32.totalorder %s41, 0
      %p387 = por %p385, %p386
      %p388 = scmp.ne.s32.totalorder %s374, %s375
      %p389 = scmp.eq.s32.totalorder %s42, 1
      %p390 = por %p388, %p389
      %p392 = scmp.ne.s32.totalorder %s375, %s391
      %p393 = scmp.eq.s32.totalorder %s42, 0
      %p394 = por %p392, %p393
      %s396 = sadd.s32 %s395, 1
      %p399 = scmp.eq.s32.totalorder %s36, 1
      %p400 = scmp.ne.s32.totalorder %s395, %s397
      %p401 = scmp.eq.s32.totalorder %s36, 0
      %p402 = por %p400, %p401
      %p403 = scmp.ne.s32.totalorder %s395, %s397
      %p404 = scmp.eq.s32.totalorder %s41, 1
      %p405 = por %p403, %p404
      %p406 = scmp.ne.s32.totalorder %s397, %s398
      %p407 = scmp.eq.s32.totalorder %s41, 0
      %p408 = por %p406, %p407
      %p409 = scmp.ne.s32.totalorder %s397, %s398
      %p410 = scmp.eq.s32.totalorder %s42, 1
      %p411 = por %p409, %p410
      %p413 = scmp.ne.s32.totalorder %s398, %s412
      %p414 = scmp.eq.s32.totalorder %s42, 0
      %p415 = por %p413, %p414
      %s417 = sadd.s32 %s416, 1
      %p420 = scmp.eq.s32.totalorder %s36, 1
      %p421 = scmp.ne.s32.totalorder %s416, %s418
      %p422 = scmp.eq.s32.totalorder %s36, 0
      %p423 = por %p421, %p422
      %p424 = scmp.ne.s32.totalorder %s416, %s418
      %p425 = scmp.eq.s32.totalorder %s41, 1
      %p426 = por %p424, %p425
      %p427 = scmp.ne.s32.totalorder %s418, %s419
      %p428 = scmp.eq.s32.totalorder %s41, 0
      %p429 = por %p427, %p428
      %p430 = scmp.ne.s32.totalorder %s418, %s419
      %p431 = scmp.eq.s32.totalorder %s42, 1
      %p432 = por %p430, %p431
      %p434 = scmp.ne.s32.totalorder %s419, %s433
      %p435 = scmp.eq.s32.totalorder %s42, 0
      %p436 = por %p434, %p435
      %s438 = sadd.s32 %s437, 1
      %p441 = scmp.eq.s32.totalorder %s36, 1
      %p442 = scmp.ne.s32.totalorder %s437, %s439
      %p443 = scmp.eq.s32.totalorder %s36, 0
      %p444 = por %p442, %p443
      %p445 = scmp.ne.s32.totalorder %s437, %s439
      %p446 = scmp.eq.s32.totalorder %s41, 1
      %p447 = por %p445, %p446
      %p448 = scmp.ne.s32.totalorder %s439, %s440
      %p449 = scmp.eq.s32.totalorder %s41, 0
      %p450 = por %p448, %p449
      %p451 = scmp.ne.s32.totalorder %s439, %s440
      %p452 = scmp.eq.s32.totalorder %s42, 1
      %p453 = por %p451, %p452
      %p455 = scmp.ne.s32.totalorder %s440, %s454
      %p456 = scmp.eq.s32.totalorder %s42, 0
      %p457 = por %p455, %p456
      %p458 = scmp.le.s32.totalorder 1, %s36
      %p459 = scmp.lt.s32.totalorder %s36, 3
      %p460 = pnand %p458, %p459
      %p461 = pneg %p460
      // Predicated region
      $region9: #{tpu_custom_call.1} parent=5 // pred_check
        _
      $region10: #{tpu_custom_call.1} parent=5 // pred_check_branch
        %463 = sbr.rel (%p460) target = $region12
      $region11: #{tpu_custom_call.1} parent=5 // pred_region
        %s464 = ssub.s32 %s36, 1
        // Predicated region
        $region13: #{tpu_custom_call.1} parent=11 // pred_check
          %p465 = pneg %p57
        $region14: #{tpu_custom_call.1} parent=11 // pred_check_branch
          %467 = sbr.rel (%p465) target = $region16
        $region15: #{tpu_custom_call.1} parent=11 // pred_region
          %469 = vsyncadd [#allocation6], 0
          %s471 = sshll.u32 %s0, 4
          %s472 = int_to_ptr.hbm [resolvable:$true] %s471
          %s473 = sshll.u32 [#allocation5], 4
          %s474 = int_to_ptr.vmem [resolvable:$true] %s473
          %476 = dma.hbm_to_vmem [thread:$0]  %s472, 128, %s474, [#allocation6]
        $region16: #{tpu_custom_call.1} parent=11 // pred_fallthru
          _
        // Predicated region
        $region17: #{tpu_custom_call.1} parent=11 // pred_check
          %p477 = pneg %p78
        $region18: #{tpu_custom_call.1} parent=11 // pred_check_branch
          %479 = sbr.rel (%p477) target = $region20
        $region19: #{tpu_custom_call.1} parent=11 // pred_region
          _
        $region20: #{tpu_custom_call.1} parent=11 // pred_fallthru
          _
        // Predicated region
        $region21: #{tpu_custom_call.1} parent=11 // pred_check
          %p480 = pneg %p99
        $region22: #{tpu_custom_call.1} parent=11 // pred_check_branch
          %482 = sbr.rel (%p480) target = $region24
        $region23: #{tpu_custom_call.1} parent=11 // pred_region
          %484 = vsyncadd [#allocation9], 0
          %s486 = sshll.u32 %s2, 4
          %s487 = int_to_ptr.hbm [resolvable:$true] %s486
          %s488 = sshll.u32 [#allocation8], 4
          %s489 = int_to_ptr.vmem [resolvable:$true] %s488
          %491 = dma.hbm_to_vmem [thread:$0]  %s487, 128, %s489, [#allocation9]
        $region24: #{tpu_custom_call.1} parent=11 // pred_fallthru
          _
        // Predicated region
        $region25: #{tpu_custom_call.1} parent=11 // pred_check
          %p492 = pneg %p120
        $region26: #{tpu_custom_call.1} parent=11 // pred_check_branch
          %494 = sbr.rel (%p492) target = $region28
        $region27: #{tpu_custom_call.1} parent=11 // pred_region
          _
        $region28: #{tpu_custom_call.1} parent=11 // pred_fallthru
          _
        // Predicated region
        $region29: #{tpu_custom_call.1} parent=11 // pred_check
          %p495 = pneg %p141
        $region30: #{tpu_custom_call.1} parent=11 // pred_check_branch
          %497 = sbr.rel (%p495) target = $region32
        $region31: #{tpu_custom_call.1} parent=11 // pred_region
          _
        $region32: #{tpu_custom_call.1} parent=11 // pred_fallthru
          _
        // Predicated region
        $region33: #{tpu_custom_call.1} parent=11 // pred_check
          %p498 = pneg %p162
        $region34: #{tpu_custom_call.1} parent=11 // pred_check_branch
          %500 = sbr.rel (%p498) target = $region36
        $region35: #{tpu_custom_call.1} parent=11 // pred_region
          %502 = vsyncadd [#allocation9], 0
          %s503 = sshll.u32 %s5, 4
          %s504 = int_to_ptr.hbm [resolvable:$true] %s503
          %s505 = sshll.u32 [#allocation10], 4
          %s506 = int_to_ptr.vmem [resolvable:$true] %s505
          %511 = dma.hbm_to_vmem [thread:$0]  %s504, 256, %s506, [#allocation9], 64, 64, 4
        $region36: #{tpu_custom_call.1} parent=11 // pred_fallthru
          _
        // Predicated region
        $region37: #{tpu_custom_call.1} parent=11 // pred_check
          %p512 = pneg %p183
        $region38: #{tpu_custom_call.1} parent=11 // pred_check_branch
          %514 = sbr.rel (%p512) target = $region40
        $region39: #{tpu_custom_call.1} parent=11 // pred_region
          _
        $region40: #{tpu_custom_call.1} parent=11 // pred_fallthru
          _
        // Predicated region
        $region41: #{tpu_custom_call.1} parent=11 // pred_check
          %p515 = pneg %p204
        $region42: #{tpu_custom_call.1} parent=11 // pred_check_branch
          %517 = sbr.rel (%p515) target = $region44
        $region43: #{tpu_custom_call.1} parent=11 // pred_region
          _
        $region44: #{tpu_custom_call.1} parent=11 // pred_fallthru
          _
        // Predicated region
        $region45: #{tpu_custom_call.1} parent=11 // pred_check
          %p518 = pneg %p225
        $region46: #{tpu_custom_call.1} parent=11 // pred_check_branch
          %520 = sbr.rel (%p518) target = $region48
        $region47: #{tpu_custom_call.1} parent=11 // pred_region
          _
        $region48: #{tpu_custom_call.1} parent=11 // pred_fallthru
          _
        // Predicated region
        $region49: #{tpu_custom_call.1} parent=11 // pred_check
          %p521 = pneg %p246
        $region50: #{tpu_custom_call.1} parent=11 // pred_check_branch
          %523 = sbr.rel (%p521) target = $region52
        $region51: #{tpu_custom_call.1} parent=11 // pred_region
          _
        $region52: #{tpu_custom_call.1} parent=11 // pred_fallthru
          _
        // Predicated region
        $region53: #{tpu_custom_call.1} parent=11 // pred_check
          %p524 = pneg %p267
        $region54: #{tpu_custom_call.1} parent=11 // pred_check_branch
          %526 = sbr.rel (%p524) target = $region56
        $region55: #{tpu_custom_call.1} parent=11 // pred_region
          _
        $region56: #{tpu_custom_call.1} parent=11 // pred_fallthru
          _
        // Predicated region
        $region57: #{tpu_custom_call.1} parent=11 // pred_check
          %p527 = pneg %p288
        $region58: #{tpu_custom_call.1} parent=11 // pred_check_branch
          %529 = sbr.rel (%p527) target = $region60
        $region59: #{tpu_custom_call.1} parent=11 // pred_region
          _
        $region60: #{tpu_custom_call.1} parent=11 // pred_fallthru
          _
        // Predicated region
        $region61: #{tpu_custom_call.1} parent=11 // pred_check
          %p530 = pneg %p309
        $region62: #{tpu_custom_call.1} parent=11 // pred_check_branch
          %532 = sbr.rel (%p530) target = $region64
        $region63: #{tpu_custom_call.1} parent=11 // pred_region
          _
        $region64: #{tpu_custom_call.1} parent=11 // pred_fallthru
          _
      $region12: #{tpu_custom_call.1} parent=5 // pred_fallthru
        _
      %p533 = scmp.lt.s32.totalorder %s36, 2
      // Predicated region
      $region65: #{tpu_custom_call.1} parent=5 // pred_check
        %p534 = pneg %p533
      $region66: #{tpu_custom_call.1} parent=5 // pred_check_branch
        %536 = sbr.rel (%p534) target = $region68
      $region67: #{tpu_custom_call.1} parent=5 // pred_region
        // Predicated region
        $region69: #{tpu_custom_call.1} parent=67 // pred_check
          %p537 = pneg %p329
        $region70: #{tpu_custom_call.1} parent=67 // pred_check_branch
          %539 = sbr.rel (%p537) target = $region72
        $region71: #{tpu_custom_call.1} parent=67 // pred_region
          %s540 = sand.u32 %s319, 1
          %s541 = scalar_lea.sflag [#allocation12], %s540
          %s542 = sand.u32 %s319, 1
          %s543 = smul.addr %s542, 16
          %s544 = scalar_lea.vmem [#allocation11], %s543
          %546 = vsyncadd %s541, 0
          %s547 = smul.addr %s36, 4
          %s548 = scalar_lea.hbm %s13, %s547
          %s549 = sshll.u32 %s548, 4
          %s550 = int_to_ptr.hbm [resolvable:$true] %s549
          %s551 = sshll.u32 %s544, 4
          %s552 = int_to_ptr.vmem [resolvable:$true] %s551
          %557 = dma.hbm_to_vmem [thread:$0]  %s550, 256, %s552, %s541, 128, 64, 4
        $region72: #{tpu_custom_call.1} parent=67 // pred_fallthru
          _
        // Predicated region
        $region73: #{tpu_custom_call.1} parent=67 // pred_check
          %p558 = pneg %p355
        $region74: #{tpu_custom_call.1} parent=67 // pred_check_branch
          %560 = sbr.rel (%p558) target = $region76
        $region75: #{tpu_custom_call.1} parent=67 // pred_region
          %p561 = scmp.lt.s32.totalorder %s36, 1
          %s562 = scalar_select %p561, %s36, 1
          %s563 = scalar_lea.vmem %s14, %s562
        $region76: #{tpu_custom_call.1} parent=67 // pred_fallthru
          _
      $region68: #{tpu_custom_call.1} parent=5 // pred_fallthru
        _
      %p564 = scmp.le.s32.totalorder 1, %s36
      %p565 = scmp.lt.s32.totalorder %s36, 3
      %p566 = pnand %p564, %p565
      %p567 = pneg %p566
      // Predicated region
      $region77: #{tpu_custom_call.1} parent=5 // pred_check
        _
      $region78: #{tpu_custom_call.1} parent=5 // pred_check_branch
        %569 = sbr.rel (%p566) target = $region80
      $region79: #{tpu_custom_call.1} parent=5 // pred_region
        %s570 = ssub.s32 %s36, 1
        // Predicated region
        $region81: #{tpu_custom_call.1} parent=79 // pred_check
          %p571 = pneg %p57
        $region82: #{tpu_custom_call.1} parent=79 // pred_check_branch
          %573 = sbr.rel (%p571) target = $region84
        $region83: #{tpu_custom_call.1} parent=79 // pred_region
          %575 = dma.done [#allocation6], 128
        $region84: #{tpu_custom_call.1} parent=79 // pred_fallthru
          _
        // Predicated region
        $region85: #{tpu_custom_call.1} parent=79 // pred_check
          %p576 = pneg %p99
        $region86: #{tpu_custom_call.1} parent=79 // pred_check_branch
          %578 = sbr.rel (%p576) target = $region88
        $region87: #{tpu_custom_call.1} parent=79 // pred_region
          %580 = dma.done [#allocation9], 128
        $region88: #{tpu_custom_call.1} parent=79 // pred_fallthru
          _
        // Predicated region
        $region89: #{tpu_custom_call.1} parent=79 // pred_check
          %p581 = pneg %p162
        $region90: #{tpu_custom_call.1} parent=79 // pred_check_branch
          %583 = sbr.rel (%p581) target = $region92
        $region91: #{tpu_custom_call.1} parent=79 // pred_region
          %585 = dma.done [#allocation9], 256
        $region92: #{tpu_custom_call.1} parent=79 // pred_fallthru
          _
        %s586 = sand.u32 %s322, 1
        %s587 = scalar_lea.sflag [#allocation12], %s586
        %s588 = sand.u32 %s322, 1
        %s589 = smul.addr %s588, 16
        %s590 = scalar_lea.vmem [#allocation11], %s589
        // Predicated region
        $region93: #{tpu_custom_call.1} parent=79 // pred_check
          %p591 = pneg %p335
        $region94: #{tpu_custom_call.1} parent=79 // pred_check_branch
          %593 = sbr.rel (%p591) target = $region96
        $region95: #{tpu_custom_call.1} parent=79 // pred_region
          %595 = dma.done %s587, 256
        $region96: #{tpu_custom_call.1} parent=79 // pred_fallthru
          _
        %p596 = pneg %p57
        %p597 = pneg %p54
        %p598 = pneg %p78
        %p599 = pneg %p75
        %p600 = pneg %p99
        %p601 = pneg %p96
        %p602 = pneg %p120
        %p603 = pneg %p117
        %p604 = pneg %p141
        %p605 = pneg %p138
        %p606 = pneg %p162
        %p607 = pneg %p159
        %p608 = pneg %p183
        %p609 = pneg %p180
        %p610 = pneg %p204
        %p611 = pneg %p201
        %p612 = pneg %p225
        %p613 = pneg %p222
        %p614 = pneg %p246
        %p615 = pneg %p243
        %p616 = pneg %p267
        %p617 = pneg %p264
        %p618 = pneg %p288
        %p619 = pneg %p285
        %p620 = pneg %p309
        %p621 = pneg %p306
        %s622 = sand.u32 %s322, 1
        %s623 = scalar_lea.sflag [#allocation12], %s622
        %s624 = sand.u32 %s322, 1
        %s625 = smul.addr %s624, 16
        %s626 = scalar_lea.vmem [#allocation11], %s625
        %p627 = pneg %p335
        %p628 = pneg %p332
        %p629 = scmp.lt.s32.totalorder %s41, 1
        %s630 = scalar_select %p629, %s41, 1
        %s631 = scalar_lea.vmem %s14, %s630
        %p632 = pneg %p361
        %p633 = pneg %p358
        %p634 = pneg %p387
        %p635 = pneg %p384
        %s636 = sand.u32 %s374, 1
        %s637 = scalar_lea.sflag [#allocation7], %s636
        %s638 = sand.u32 %s374, 1
        %s639 = smul.addr %s638, 8
        %s640 = scalar_lea.vmem [#allocation13], %s639
        %p641 = pneg %p408
        %p642 = pneg %p405
        %p643 = pneg %p429
        %p644 = pneg %p426
        %p645 = pneg %p450
        %p646 = pneg %p447
        %p647 = scmp.lt.s32.totalorder %s41, 1
        %s648 = scalar_select %p647, %s41, 1
        %s649 = scalar_lea.vmem %s14, %s648
        %p651 = scmp.eq.s32.totalorder %s41, 0
        // Predicated region
        $region97: #{tpu_custom_call.1} parent=79 // pred_check
          %p652 = pneg %p651
        $region98: #{tpu_custom_call.1} parent=79 // pred_check_branch
          %654 = sbr.rel (%p652) target = $region100
        $region99: #{tpu_custom_call.1} parent=79 // pred_region
          %v655 = vld [vmem:[#allocation5] sm:$0xff]
          %v656 = vld [vmem:[#allocation8] sm:$0xff]
          %v657 = vld [vmem:[%s1] sm:$0xff]
          %v658 = vld [vmem:[%s1 + $0x8] sm:$0xff]
          %v659 = vld [vmem:[%s1 + $0x10] sm:$0xff]
          %v660 = vld [vmem:[%s1 + $0x18] sm:$0xff]
          %v661 = vld [vmem:[%s1 + $0x20] sm:$0xff]
          %v662 = vld [vmem:[%s1 + $0x28] sm:$0xff]
          %v663 = vld [vmem:[%s1 + $0x30] sm:$0xff]
          %v664 = vld [vmem:[%s1 + $0x38] sm:$0xff]
          %v665 = vpack.c.bf16 %v658, %v657
          %v666 = vpack.c.bf16 %v660, %v659
          %v667 = vpack.c.bf16 %v662, %v661
          %v668 = vpack.c.bf16 %v664, %v663
          %v669 = vld [vmem:[#allocation10] sm:$0xf]
          %v670 = vld [vmem:[#allocation10 + $0x4] sm:$0xf]
          %v671 = vld [vmem:[#allocation10 + $0x8] sm:$0xf]
          %v672 = vld [vmem:[#allocation10 + $0xc] sm:$0xf]
          %v673 = vld [vmem:[%s6] sm:$0x1]
          %v675 = vperm.slane %v673, 0
          %v681 = vunpack.c.l.b16 %v669
          %v682 = vunpack.c.l.b16 %v670
          %v683 = vunpack.c.l.b16 %v671
          %v684 = vunpack.c.l.b16 %v672
          %v685 = vpack.c.b16 %v682, %v681
          %v686 = vpack.c.b16 %v684, %v683
          %vm689 = vcmask 261120
          %v691 = vsel %vm689, %v665, 0
          %v694 = vsel %vm689, %v666, 0
          %v697 = vsel %vm689, %v667, 0
          %v700 = vsel %vm689, %v668, 0
          %702 = vmatpush.bf16.msra.mxu0 0
          %703 = vmatpush.bf16.msra.mxu0 0
          %704 = vmatpush.bf16.msra.mxu0 0
          %705 = vmatpush.bf16.msra.mxu0 0
          %706 = vmatpush.bf16.msra.mxu0 0
          %707 = vmatpush.bf16.msra.mxu0 0
          %708 = vmatpush.bf16.msra.mxu0 %v686
          %709 = vmatpush.bf16.msra.mxu0 %v685
          %710 = vmatmul.bf16.gmra.mxu0 %v691
          %v711 = vpop.f32.mrf.mxu0
          %v712 = vadd.f32 %v675, %v711
          %v713 = vpop.f32.mrf.mxu0
          %v714 = vadd.f32 %v675, %v713
          %715 = vmatmul.bf16.gmra.mxu0 %v694
          %v716 = vpop.f32.mrf.mxu0
          %v717 = vadd.f32 %v675, %v716
          %v718 = vpop.f32.mrf.mxu0
          %v719 = vadd.f32 %v675, %v718
          %720 = vmatmul.bf16.gmra.mxu0 %v697
          %v721 = vpop.f32.mrf.mxu0
          %v722 = vadd.f32 %v675, %v721
          %v723 = vpop.f32.mrf.mxu0
          %v724 = vadd.f32 %v675, %v723
          %725 = vmatmul.bf16.gmra.mxu0 %v700
          %v726 = vpop.f32.mrf.mxu0
          %v727 = vadd.f32 %v675, %v726
          %v728 = vpop.f32.mrf.mxu0
          %v729 = vadd.f32 %v675, %v728
          %730 = vdwg.mxu0
          %v731 = vld [vmem:[%s3] sm:$0xff]
          %v732 = vld [vmem:[%s3 + $0x8] sm:$0xff]
          %v733 = vld [vmem:[%s3 + $0x10] sm:$0xff]
          %v734 = vld [vmem:[%s3 + $0x18] sm:$0xff]
          %v735 = vld [vmem:[%s4] sm:$0x1]
          %v737 = vperm.slane %v735, 0
          %v740 = vsel %vm689, %v656, 0
          %742 = vmatpush.msra.mxu0 0.0
          %743 = vmatpush.msra.mxu0 0.0
          %744 = vmatpush.msra.mxu0 0.0
          %745 = vmatpush.msra.mxu0 0.0
          %746 = vmatpush.msra.mxu0 0.0
          %747 = vmatpush.msra.mxu0 0.0
          %748 = vmatpush.msra.mxu0 0.0
          %749 = vmatpush.msra.mxu0 0.0
          %750 = vmatpush.msra.mxu0 0.0
          %751 = vmatpush.msra.mxu0 0.0
          %752 = vmatpush.msra.mxu0 0.0
          %753 = vmatpush.msra.mxu0 0.0
          %754 = vmatpush.msra.mxu0 %v734
          %755 = vmatpush.msra.mxu0 %v733
          %756 = vmatpush.msra.mxu0 %v732
          %757 = vmatpush.msra.mxu0 %v731
          %758 = vmatmul.f32.gmra.mxu0 %v740
          %v759 = vpop.f32.mrf.mxu0
          %v760 = vadd.f32 %v737, %v759
          %761 = vdwg.mxu0
          %v763 = vrot.slane %v760, 1
          %v764 = vrot.slane %v760, 2
          %v765 = vrot.slane %v760, 3
          %v766 = vrot.slane %v760, 4
          %v767 = vrot.slane %v760, 5
          %v768 = vrot.slane %v760, 6
          %v769 = vrot.slane %v760, 7
          %v770 = vperm.slane %v760, 0
          %v771 = vperm.slane %v763, 0
          %v772 = vperm.slane %v764, 0
          %v773 = vperm.slane %v765, 0
          %v774 = vperm.slane %v766, 0
          %v775 = vperm.slane %v767, 0
          %v776 = vperm.slane %v768, 0
          %v777 = vperm.slane %v769, 0
          %v786 = vadd.f32 %v712, %v770
          %v787 = vadd.f32 %v714, %v771
          %v788 = vadd.f32 %v717, %v772
          %v789 = vadd.f32 %v719, %v773
          %v790 = vadd.f32 %v722, %v774
          %v791 = vadd.f32 %v724, %v775
          %v792 = vadd.f32 %v727, %v776
          %v793 = vadd.f32 %v729, %v777
          %v794 = vtanh.pop %v786
          %v795 = vtanh.pop %v787
          %v796 = vtanh.pop %v788
          %v797 = vtanh.pop %v789
          %v798 = vtanh.pop %v790
          %v799 = vtanh.pop %v791
          %v800 = vtanh.pop %v792
          %v801 = vtanh.pop %v793
          %v802 = vld [vmem:[%s7] sm:$0x1]
          %v804 = vperm.slane %v802, 0
          %v806 = vmul.f32 %v794, %v804
          %v807 = vmul.f32 %v795, %v804
          %v808 = vmul.f32 %v796, %v804
          %v809 = vmul.f32 %v797, %v804
          %v810 = vmul.f32 %v798, %v804
          %v811 = vmul.f32 %v799, %v804
          %v812 = vmul.f32 %v800, %v804
          %v813 = vmul.f32 %v801, %v804
          %v814 = vsel %vm689, %v806, 0.0
          %815 = vadd.xlane.f32.xlu0 %v814
          %v816 = vpop.xlane.xlu0 %815
          %v817 = vsel %vm689, %v807, 0.0
          %818 = vadd.xlane.f32.xlu0 %v817
          %v819 = vpop.xlane.xlu0 %818
          %v820 = vsel %vm689, %v808, 0.0
          %821 = vadd.xlane.f32.xlu0 %v820
          %v822 = vpop.xlane.xlu0 %821
          %v823 = vsel %vm689, %v809, 0.0
          %824 = vadd.xlane.f32.xlu0 %v823
          %v825 = vpop.xlane.xlu0 %824
          %v826 = vsel %vm689, %v810, 0.0
          %827 = vadd.xlane.f32.xlu0 %v826
          %v828 = vpop.xlane.xlu0 %827
          %v829 = vsel %vm689, %v811, 0.0
          %830 = vadd.xlane.f32.xlu0 %v829
          %v831 = vpop.xlane.xlu0 %830
          %v832 = vsel %vm689, %v812, 0.0
          %833 = vadd.xlane.f32.xlu0 %v832
          %v834 = vpop.xlane.xlu0 %833
          %v835 = vsel %vm689, %v813, 0.0
          %836 = vadd.xlane.f32.xlu0 %v835
          %v837 = vpop.xlane.xlu0 %836
          %v838 = vld [vmem:[#allocation4] sm:$0x1]
          %v840 = vperm.slane %v838, 0
          %841 = vset.pattern.permute.xlu0 0
          %842 = vperm.xlu0 %841, %v840
          %v843 = vpop.permute.xlu0 %842
          %v845 = vadd.f32 %v816, %v843
          %v846 = vadd.f32 %v819, %v843
          %v847 = vadd.f32 %v822, %v843
          %v848 = vadd.f32 %v825, %v843
          %v849 = vadd.f32 %v828, %v843
          %v850 = vadd.f32 %v831, %v843
          %v851 = vadd.f32 %v834, %v843
          %v852 = vadd.f32 %v837, %v843
          %v861 = vlaneseq
          %v862 = vand.u32 %v861, 127
          %v863 = vperm.slane %v845, %v862
          %v864 = vperm.slane %v846, %v862
          %v865 = vperm.slane %v847, %v862
          %v866 = vperm.slane %v848, %v862
          %v867 = vperm.slane %v849, %v862
          %v868 = vperm.slane %v850, %v862
          %v869 = vperm.slane %v851, %v862
          %v870 = vperm.slane %v852, %v862
          %vm871 = vcmask 1041409
          %v872 = vsel %vm871, %v864, %v863
          %vm873 = vcmask 1042434
          %v874 = vsel %vm873, %v865, %v872
          %vm875 = vcmask 1043459
          %v876 = vsel %vm875, %v866, %v874
          %vm877 = vcmask 1044484
          %v878 = vsel %vm877, %v867, %v876
          %vm879 = vcmask 1045509
          %v880 = vsel %vm879, %v868, %v878
          %vm881 = vcmask 1046534
          %v882 = vsel %vm881, %v869, %v880
          %vm883 = vcmask 1047559
          %v884 = vsel %vm883, %v870, %v882
          %vm886 = vcmask 64512
          %v887 = vsel %vm886, %v884, -inf
          %888 = vmax.xlane.f32.xlu0 %v887
          %v889 = vpop.xlane.xlu0 %888
          %v891 = vperm.slane %v889, 0
          %v892 = vperm.slane %v889, 1
          %v893 = vperm.slane %v889, 2
          %v894 = vperm.slane %v889, 3
          %v895 = vperm.slane %v889, 4
          %v896 = vperm.slane %v889, 5
          %v897 = vperm.slane %v889, 6
          %v898 = vperm.slane %v889, 7
          %v907 = vsub.f32 %v845, %v891
          %v908 = vsub.f32 %v846, %v892
          %v909 = vsub.f32 %v847, %v893
          %v910 = vsub.f32 %v848, %v894
          %v911 = vsub.f32 %v849, %v895
          %v912 = vsub.f32 %v850, %v896
          %v913 = vsub.f32 %v851, %v897
          %v914 = vsub.f32 %v852, %v898
          %v915 = vmul.f32 %v907, 1.442695
          %v916 = vpow.pop %v915
          %v917 = vmul.f32 %v908, 1.442695
          %v918 = vpow.pop %v917
          %v919 = vmul.f32 %v909, 1.442695
          %v920 = vpow.pop %v919
          %v921 = vmul.f32 %v910, 1.442695
          %v922 = vpow.pop %v921
          %v923 = vmul.f32 %v911, 1.442695
          %v924 = vpow.pop %v923
          %v925 = vmul.f32 %v912, 1.442695
          %v926 = vpow.pop %v925
          %v927 = vmul.f32 %v913, 1.442695
          %v928 = vpow.pop %v927
          %v929 = vmul.f32 %v914, 1.442695
          %v930 = vpow.pop %v929
          %939 = vset.pattern.permute.xlu0 0
          %940 = vperm.xlu0 %939, %v916
          %v941 = vpop.permute.xlu0 %940
          %942 = vset.pattern.permute.xlu0 0
          %943 = vperm.xlu0 %942, %v918
          %v944 = vpop.permute.xlu0 %943
          %945 = vset.pattern.permute.xlu0 0
          %946 = vperm.xlu0 %945, %v920
          %v947 = vpop.permute.xlu0 %946
          %948 = vset.pattern.permute.xlu0 0
          %949 = vperm.xlu0 %948, %v922
          %v950 = vpop.permute.xlu0 %949
          %951 = vset.pattern.permute.xlu0 0
          %952 = vperm.xlu0 %951, %v924
          %v953 = vpop.permute.xlu0 %952
          %954 = vset.pattern.permute.xlu0 0
          %955 = vperm.xlu0 %954, %v926
          %v956 = vpop.permute.xlu0 %955
          %957 = vset.pattern.permute.xlu0 0
          %958 = vperm.xlu0 %957, %v928
          %v959 = vpop.permute.xlu0 %958
          %960 = vset.pattern.permute.xlu0 0
          %961 = vperm.xlu0 %960, %v930
          %v962 = vpop.permute.xlu0 %961
          %v963 = vperm.slane %v941, %v862
          %v964 = vperm.slane %v944, %v862
          %v965 = vperm.slane %v947, %v862
          %v966 = vperm.slane %v950, %v862
          %v967 = vperm.slane %v953, %v862
          %v968 = vperm.slane %v956, %v862
          %v969 = vperm.slane %v959, %v862
          %v970 = vperm.slane %v962, %v862
          %v971 = vsel %vm871, %v964, %v963
          %v972 = vsel %vm873, %v965, %v971
          %v973 = vsel %vm875, %v966, %v972
          %v974 = vsel %vm877, %v967, %v973
          %v975 = vsel %vm879, %v968, %v974
          %v976 = vsel %vm881, %v969, %v975
          %v977 = vsel %vm883, %v970, %v976
          %v979 = vsel %vm886, %v977, 0.0
          %980 = vadd.xlane.f32.xlu0 %v979
          %v981 = vpop.xlane.xlu0 %980
          %v983 = vperm.slane %v981, 0
          %v984 = vperm.slane %v981, 1
          %v985 = vperm.slane %v981, 2
          %v986 = vperm.slane %v981, 3
          %v987 = vperm.slane %v981, 4
          %v988 = vperm.slane %v981, 5
          %v989 = vperm.slane %v981, 6
          %v990 = vperm.slane %v981, 7
          %v999 = vrcp.pop %v983
          %v1000 = vmul.f32 %v983, %v999
          %v1001 = vsub.f32 1.0, %v1000
          %v1002 = vmul.f32 %v999, %v1001
          %v1003 = vadd.f32 %v999, %v1002
          %vm1004 = vweird.f32 %v983
          %vm1005 = vweird.f32 %v999
          %vm1006 = vmor %vm1004, %vm1005
          %v1007 = vsel %vm1006, %v999, %v1003
          %v1008 = vand.u32 2147483647, %v983
          %vm1009 = vcmp.eq.f32.partialorder %v1008, 8.507059e+37
          %v1010 = vand.u32 %v983, 2147483648
          %v1011 = vor.u32 1.1754944e-38, %v1010
          %v1012 = vsel %vm1009, %v1011, %v1007
          %v1013 = vmul.f32 %v916, %v1012
          %v1014 = vrcp.pop %v984
          %v1015 = vmul.f32 %v984, %v1014
          %v1016 = vsub.f32 1.0, %v1015
          %v1017 = vmul.f32 %v1014, %v1016
          %v1018 = vadd.f32 %v1014, %v1017
          %vm1019 = vweird.f32 %v984
          %vm1020 = vweird.f32 %v1014
          %vm1021 = vmor %vm1019, %vm1020
          %v1022 = vsel %vm1021, %v1014, %v1018
          %v1023 = vand.u32 2147483647, %v984
          %vm1024 = vcmp.eq.f32.partialorder %v1023, 8.507059e+37
          %v1025 = vand.u32 %v984, 2147483648
          %v1026 = vor.u32 1.1754944e-38, %v1025
          %v1027 = vsel %vm1024, %v1026, %v1022
          %v1028 = vmul.f32 %v918, %v1027
          %v1029 = vrcp.pop %v985
          %v1030 = vmul.f32 %v985, %v1029
          %v1031 = vsub.f32 1.0, %v1030
          %v1032 = vmul.f32 %v1029, %v1031
          %v1033 = vadd.f32 %v1029, %v1032
          %vm1034 = vweird.f32 %v985
          %vm1035 = vweird.f32 %v1029
          %vm1036 = vmor %vm1034, %vm1035
          %v1037 = vsel %vm1036, %v1029, %v1033
          %v1038 = vand.u32 2147483647, %v985
          %vm1039 = vcmp.eq.f32.partialorder %v1038, 8.507059e+37
          %v1040 = vand.u32 %v985, 2147483648
          %v1041 = vor.u32 1.1754944e-38, %v1040
          %v1042 = vsel %vm1039, %v1041, %v1037
          %v1043 = vmul.f32 %v920, %v1042
          %v1044 = vrcp.pop %v986
          %v1045 = vmul.f32 %v986, %v1044
          %v1046 = vsub.f32 1.0, %v1045
          %v1047 = vmul.f32 %v1044, %v1046
          %v1048 = vadd.f32 %v1044, %v1047
          %vm1049 = vweird.f32 %v986
          %vm1050 = vweird.f32 %v1044
          %vm1051 = vmor %vm1049, %vm1050
          %v1052 = vsel %vm1051, %v1044, %v1048
          %v1053 = vand.u32 2147483647, %v986
          %vm1054 = vcmp.eq.f32.partialorder %v1053, 8.507059e+37
          %v1055 = vand.u32 %v986, 2147483648
          %v1056 = vor.u32 1.1754944e-38, %v1055
          %v1057 = vsel %vm1054, %v1056, %v1052
          %v1058 = vmul.f32 %v922, %v1057
          %v1059 = vrcp.pop %v987
          %v1060 = vmul.f32 %v987, %v1059
          %v1061 = vsub.f32 1.0, %v1060
          %v1062 = vmul.f32 %v1059, %v1061
          %v1063 = vadd.f32 %v1059, %v1062
          %vm1064 = vweird.f32 %v987
          %vm1065 = vweird.f32 %v1059
          %vm1066 = vmor %vm1064, %vm1065
          %v1067 = vsel %vm1066, %v1059, %v1063
          %v1068 = vand.u32 2147483647, %v987
          %vm1069 = vcmp.eq.f32.partialorder %v1068, 8.507059e+37
          %v1070 = vand.u32 %v987, 2147483648
          %v1071 = vor.u32 1.1754944e-38, %v1070
          %v1072 = vsel %vm1069, %v1071, %v1067
          %v1073 = vmul.f32 %v924, %v1072
          %v1074 = vrcp.pop %v988
          %v1075 = vmul.f32 %v988, %v1074
          %v1076 = vsub.f32 1.0, %v1075
          %v1077 = vmul.f32 %v1074, %v1076
          %v1078 = vadd.f32 %v1074, %v1077
          %vm1079 = vweird.f32 %v988
          %vm1080 = vweird.f32 %v1074
          %vm1081 = vmor %vm1079, %vm1080
          %v1082 = vsel %vm1081, %v1074, %v1078
          %v1083 = vand.u32 2147483647, %v988
          %vm1084 = vcmp.eq.f32.partialorder %v1083, 8.507059e+37
          %v1085 = vand.u32 %v988, 2147483648
          %v1086 = vor.u32 1.1754944e-38, %v1085
          %v1087 = vsel %vm1084, %v1086, %v1082
          %v1088 = vmul.f32 %v926, %v1087
          %v1089 = vrcp.pop %v989
          %v1090 = vmul.f32 %v989, %v1089
          %v1091 = vsub.f32 1.0, %v1090
          %v1092 = vmul.f32 %v1089, %v1091
          %v1093 = vadd.f32 %v1089, %v1092
          %vm1094 = vweird.f32 %v989
          %vm1095 = vweird.f32 %v1089
          %vm1096 = vmor %vm1094, %vm1095
          %v1097 = vsel %vm1096, %v1089, %v1093
          %v1098 = vand.u32 2147483647, %v989
          %vm1099 = vcmp.eq.f32.partialorder %v1098, 8.507059e+37
          %v1100 = vand.u32 %v989, 2147483648
          %v1101 = vor.u32 1.1754944e-38, %v1100
          %v1102 = vsel %vm1099, %v1101, %v1097
          %v1103 = vmul.f32 %v928, %v1102
          %v1104 = vrcp.pop %v990
          %v1105 = vmul.f32 %v990, %v1104
          %v1106 = vsub.f32 1.0, %v1105
          %v1107 = vmul.f32 %v1104, %v1106
          %v1108 = vadd.f32 %v1104, %v1107
          %vm1109 = vweird.f32 %v990
          %vm1110 = vweird.f32 %v1104
          %vm1111 = vmor %vm1109, %vm1110
          %v1112 = vsel %vm1111, %v1104, %v1108
          %v1113 = vand.u32 2147483647, %v990
          %vm1114 = vcmp.eq.f32.partialorder %v1113, 8.507059e+37
          %v1115 = vand.u32 %v990, 2147483648
          %v1116 = vor.u32 1.1754944e-38, %v1115
          %v1117 = vsel %vm1114, %v1116, %v1112
          %v1118 = vmul.f32 %v930, %v1117
          %1120 = vset.pattern.permute.xlu0 0
          %1121 = vperm.xlu0 %1120, %v1013
          %v1122 = vpop.permute.xlu0 %1121
          %1125 = vset.pattern.permute.xlu0 0
          %1126 = vperm.xlu0 %1125, %v1028
          %v1127 = vpop.permute.xlu0 %1126
          %1130 = vset.pattern.permute.xlu0 0
          %1131 = vperm.xlu0 %1130, %v1043
          %v1132 = vpop.permute.xlu0 %1131
          %1135 = vset.pattern.permute.xlu0 0
          %1136 = vperm.xlu0 %1135, %v1058
          %v1137 = vpop.permute.xlu0 %1136
          %1140 = vset.pattern.permute.xlu0 0
          %1141 = vperm.xlu0 %1140, %v1073
          %v1142 = vpop.permute.xlu0 %1141
          %1145 = vset.pattern.permute.xlu0 0
          %1146 = vperm.xlu0 %1145, %v1088
          %v1147 = vpop.permute.xlu0 %1146
          %1150 = vset.pattern.permute.xlu0 0
          %1151 = vperm.xlu0 %1150, %v1103
          %v1152 = vpop.permute.xlu0 %1151
          %1155 = vset.pattern.permute.xlu0 0
          %1156 = vperm.xlu0 %1155, %v1118
          %v1157 = vpop.permute.xlu0 %1156
          %v1159 = vmul.f32 %v1122, %v712
          %v1160 = vmul.f32 %v1127, %v714
          %v1161 = vmul.f32 %v1132, %v717
          %v1162 = vmul.f32 %v1137, %v719
          %v1163 = vmul.f32 %v1142, %v722
          %v1164 = vmul.f32 %v1147, %v724
          %v1165 = vmul.f32 %v1152, %v727
          %v1166 = vmul.f32 %v1157, %v729
          %vm1167 = vcmask 523520
          %v1168 = vsel %vm1167, %v1159, 0.0
          %v1169 = vrot.slane %v1168, 4
          %v1170 = vadd.f32 %v1168, %v1169
          %v1171 = vrot.slane %v1170, 2
          %v1172 = vadd.f32 %v1170, %v1171
          %v1173 = vrot.slane %v1172, 1
          %v1174 = vadd.f32 %v1172, %v1173
          %v1175 = vsel %vm1167, %v1160, 0.0
          %v1176 = vrot.slane %v1175, 4
          %v1177 = vadd.f32 %v1175, %v1176
          %v1178 = vrot.slane %v1177, 2
          %v1179 = vadd.f32 %v1177, %v1178
          %v1180 = vrot.slane %v1179, 1
          %v1181 = vadd.f32 %v1179, %v1180
          %v1182 = vsel %vm1167, %v1161, 0.0
          %v1183 = vrot.slane %v1182, 4
          %v1184 = vadd.f32 %v1182, %v1183
          %v1185 = vrot.slane %v1184, 2
          %v1186 = vadd.f32 %v1184, %v1185
          %v1187 = vrot.slane %v1186, 1
          %v1188 = vadd.f32 %v1186, %v1187
          %v1189 = vsel %vm1167, %v1162, 0.0
          %v1190 = vrot.slane %v1189, 4
          %v1191 = vadd.f32 %v1189, %v1190
          %v1192 = vrot.slane %v1191, 2
          %v1193 = vadd.f32 %v1191, %v1192
          %v1194 = vrot.slane %v1193, 1
          %v1195 = vadd.f32 %v1193, %v1194
          %v1196 = vsel %vm1167, %v1163, 0.0
          %v1197 = vrot.slane %v1196, 4
          %v1198 = vadd.f32 %v1196, %v1197
          %v1199 = vrot.slane %v1198, 2
          %v1200 = vadd.f32 %v1198, %v1199
          %v1201 = vrot.slane %v1200, 1
          %v1202 = vadd.f32 %v1200, %v1201
          %v1203 = vsel %vm1167, %v1164, 0.0
          %v1204 = vrot.slane %v1203, 4
          %v1205 = vadd.f32 %v1203, %v1204
          %v1206 = vrot.slane %v1205, 2
          %v1207 = vadd.f32 %v1205, %v1206
          %v1208 = vrot.slane %v1207, 1
          %v1209 = vadd.f32 %v1207, %v1208
          %v1210 = vsel %vm1167, %v1165, 0.0
          %v1211 = vrot.slane %v1210, 4
          %v1212 = vadd.f32 %v1210, %v1211
          %v1213 = vrot.slane %v1212, 2
          %v1214 = vadd.f32 %v1212, %v1213
          %v1215 = vrot.slane %v1214, 1
          %v1216 = vadd.f32 %v1214, %v1215
          %v1217 = vsel %vm1167, %v1166, 0.0
          %v1218 = vrot.slane %v1217, 4
          %v1219 = vadd.f32 %v1217, %v1218
          %v1220 = vrot.slane %v1219, 2
          %v1221 = vadd.f32 %v1219, %v1220
          %v1222 = vrot.slane %v1221, 1
          %v1223 = vadd.f32 %v1221, %v1222
          %v1224 = vld [vmem:[%s9] sm:$0xff]
          %v1225 = vld [vmem:[%s9 + $0x8] sm:$0xff]
          %v1226 = vld [vmem:[%s9 + $0x10] sm:$0xff]
          %v1227 = vld [vmem:[%s9 + $0x18] sm:$0xff]
          %v1228 = vld [vmem:[%s10] sm:$0x1]
          %v1230 = vperm.slane %v1228, 0
          %v1233 = vsel %vm689, %v655, 0
          %1235 = vmatpush.msra.mxu0 0.0
          %1236 = vmatpush.msra.mxu0 0.0
          %1237 = vmatpush.msra.mxu0 0.0
          %1238 = vmatpush.msra.mxu0 0.0
          %1239 = vmatpush.msra.mxu0 0.0
          %1240 = vmatpush.msra.mxu0 0.0
          %1241 = vmatpush.msra.mxu0 0.0
          %1242 = vmatpush.msra.mxu0 0.0
          %1243 = vmatpush.msra.mxu0 0.0
          %1244 = vmatpush.msra.mxu0 0.0
          %1245 = vmatpush.msra.mxu0 0.0
          %1246 = vmatpush.msra.mxu0 0.0
          %1247 = vmatpush.msra.mxu0 %v1227
          %1248 = vmatpush.msra.mxu0 %v1226
          %1249 = vmatpush.msra.mxu0 %v1225
          %1250 = vmatpush.msra.mxu0 %v1224
          %1251 = vmatmul.f32.gmra.mxu0 %v1233
          %v1252 = vpop.f32.mrf.mxu0
          %v1253 = vadd.f32 %v1230, %v1252
          %1254 = vdwg.mxu0
          %v1255 = vld [vmem:[%s11] sm:$0xff]
          %v1256 = vld [vmem:[%s11 + $0x8] sm:$0xff]
          %v1257 = vld [vmem:[%s11 + $0x10] sm:$0xff]
          %v1258 = vld [vmem:[%s11 + $0x18] sm:$0xff]
          %v1259 = vld [vmem:[%s12] sm:$0x1]
          %v1261 = vperm.slane %v1259, 0
          %v1271 = vsel %vm871, %v1181, %v1174
          %v1272 = vsel %vm873, %v1188, %v1271
          %v1273 = vsel %vm875, %v1195, %v1272
          %v1274 = vsel %vm877, %v1202, %v1273
          %v1275 = vsel %vm879, %v1209, %v1274
          %v1276 = vsel %vm881, %v1216, %v1275
          %v1277 = vsel %vm883, %v1223, %v1276
          %1278 = vrot.lane.b32.xlu0 %v1277, 96
          %v1279 = vpop.permute.xlu0 %1278
          %v1280 = vsel %vm689, %v1279, 0
          %1282 = vmatpush.msra.mxu0 0.0
          %1283 = vmatpush.msra.mxu0 0.0
          %1284 = vmatpush.msra.mxu0 0.0
          %1285 = vmatpush.msra.mxu0 0.0
          %1286 = vmatpush.msra.mxu0 0.0
          %1287 = vmatpush.msra.mxu0 0.0
          %1288 = vmatpush.msra.mxu0 0.0
          %1289 = vmatpush.msra.mxu0 0.0
          %1290 = vmatpush.msra.mxu0 0.0
          %1291 = vmatpush.msra.mxu0 0.0
          %1292 = vmatpush.msra.mxu0 0.0
          %1293 = vmatpush.msra.mxu0 0.0
          %1294 = vmatpush.msra.mxu0 %v1258
          %1295 = vmatpush.msra.mxu0 %v1257
          %1296 = vmatpush.msra.mxu0 %v1256
          %1297 = vmatpush.msra.mxu0 %v1255
          %1298 = vmatmul.f32.gmra.mxu0 %v1280
          %v1299 = vpop.f32.mrf.mxu0
          %v1300 = vadd.f32 %v1261, %v1299
          %1301 = vdwg.mxu0
          %v1302 = vadd.f32 %v1253, %v1300
          %v1303 = vxor.u32 %v1302, 2147483648
          %v1304 = vmul.f32 %v1303, 1.442695
          %v1305 = vpow.pop %v1304
          %v1306 = vadd.f32 %v1305, 1.0
          %v1307 = vrcp.pop %v1306
          %v1308 = vmul.f32 %v1306, %v1307
          %v1309 = vsub.f32 1.0, %v1308
          %v1310 = vmul.f32 %v1307, %v1309
          %v1311 = vadd.f32 %v1307, %v1310
          %vm1312 = vweird.f32 %v1306
          %vm1313 = vweird.f32 %v1307
          %vm1314 = vmor %vm1312, %vm1313
          %v1315 = vsel %vm1314, %v1307, %v1311
          %v1316 = vand.u32 2147483647, %v1306
          %vm1317 = vcmp.eq.f32.partialorder %v1316, 8.507059e+37
          %v1318 = vand.u32 %v1306, 2147483648
          %v1319 = vor.u32 1.1754944e-38, %v1318
          %v1320 = vsel %vm1317, %v1319, %v1315
          %v1321 = vmul.f32 1.0, %v1320
          %1323 = vrot.lane.b32.xlu0 %v1300, 64
          %v1324 = vpop.permute.xlu0 %1323
          %v1326 = vmul.f32 %v1321, %v1324
          %1328 = vrot.lane.b32.xlu0 %v1326, 64
          %v1329 = vpop.permute.xlu0 %1328
          %v1331 = vadd.f32 %v1253, %v1329
          %v1332 = vtanh.pop %v1331
          %v1333 = vsub.f32 1.0, %v1321
          %1335 = vrot.lane.b32.xlu0 %v1332, 96
          %v1336 = vpop.permute.xlu0 %1335
          %v1338 = vmul.f32 %v1333, %v1336
          %v1340 = vmul.f32 %v1321, %v1277
          %v1341 = vadd.f32 %v1338, %v1340
          %1343 = vrot.lane.b32.xlu0 %v1341, 96
          %v1344 = vpop.permute.xlu0 %1343
          %1346 = vst.msk [vmem:[#allocation14] sm:$0xff] %vm689, %v1344
          %v1347 = vperm.slane %v1122, %v862
          %v1348 = vperm.slane %v1127, %v862
          %v1349 = vperm.slane %v1132, %v862
          %v1350 = vperm.slane %v1137, %v862
          %v1351 = vperm.slane %v1142, %v862
          %v1352 = vperm.slane %v1147, %v862
          %v1353 = vperm.slane %v1152, %v862
          %v1354 = vperm.slane %v1157, %v862
          %v1355 = vsel %vm871, %v1348, %v1347
          %v1356 = vsel %vm873, %v1349, %v1355
          %v1357 = vsel %vm875, %v1350, %v1356
          %v1358 = vsel %vm877, %v1351, %v1357
          %v1359 = vsel %vm879, %v1352, %v1358
          %v1360 = vsel %vm881, %v1353, %v1359
          %v1361 = vsel %vm883, %v1354, %v1360
          %1363 = vst.msk [vmem:[#allocation16] sm:$0xff] %vm886, %v1361
          %vm1364 = vcmask 7168
          %1365 = vst.msk [vmem:[#allocation2] sm:$0xff] %vm1364, -inf
          %1366 = vst.msk [vmem:[#allocation3] sm:$0xff] %vm1364, 0.0
        $region100: #{tpu_custom_call.1} parent=79 // pred_fallthru
          _
        %v1367 = vld [vmem:[#allocation14] sm:$0xff]
        %v1368 = vpack.c.bf16 %v1367, %v1367
        %v1369 = vld [vmem:[%s590] sm:$0xf]
        %v1370 = vld [vmem:[%s590 + $0x4] sm:$0xf]
        %v1371 = vld [vmem:[%s590 + $0x8] sm:$0xf]
        %v1372 = vld [vmem:[%s590 + $0xc] sm:$0xf]
        %v1373 = vld [vmem:[%s649] sm:$0x1]
        %v1375 = vperm.slane %v1373, 0
        %v1381 = vunpack.c.l.b16 %v1369
        %v1382 = vunpack.c.l.b16 %v1370
        %v1383 = vunpack.c.l.b16 %v1371
        %v1384 = vunpack.c.l.b16 %v1372
        %v1385 = vpack.c.b16 %v1382, %v1381
        %v1386 = vpack.c.b16 %v1384, %v1383
        %vm1389 = vcmask 261120
        %v1391 = vsel %vm1389, %v1368, 0
        %1393 = vmatpush.bf16.msra.mxu0 0
        %1394 = vmatpush.bf16.msra.mxu0 0
        %1395 = vmatpush.bf16.msra.mxu0 0
        %1396 = vmatpush.bf16.msra.mxu0 0
        %1397 = vmatpush.bf16.msra.mxu0 0
        %1398 = vmatpush.bf16.msra.mxu0 0
        %1399 = vmatpush.bf16.msra.mxu0 %v1386
        %1400 = vmatpush.bf16.msra.mxu0 %v1385
        %1401 = vmatmul.bf16.gmra.mxu0 %v1391
        %v1402 = vpop.f32.mrf.mxu0
        %v1403 = vadd.f32 %v1375, %v1402
        %v1404 = vpop.f32.mrf.mxu0
        %1405 = vdwg.mxu0
        %1406 = vst [vmem:[%s640] sm:$0xff] %v1403
        %1407 = vmax.xlane.f32.xlu0 %v1403
        %v1408 = vpop.xlane.xlu0 %1407
        %v1409 = vld [vmem:[#allocation2] sm:$0xff]
        %v1410 = vmax.f32 %v1409, %v1408
        %v1411 = vld [vmem:[#allocation3] sm:$0xff]
        %v1412 = vsub.f32 %v1409, %v1410
        %v1413 = vmul.f32 %v1412, 1.442695
        %v1414 = vpow.pop %v1413
        %v1415 = vmul.f32 %v1411, %v1414
        %1417 = vset.pattern.permute.xlu0 0
        %1418 = vperm.xlu0 %1417, %v1410
        %v1419 = vpop.permute.xlu0 %1418
        %v1421 = vsub.f32 %v1403, %v1419
        %v1422 = vmul.f32 %v1421, 1.442695
        %v1423 = vpow.pop %v1422
        %1424 = vadd.xlane.f32.xlu0 %v1423
        %v1425 = vpop.xlane.xlu0 %1424
        %v1426 = vadd.f32 %v1415, %v1425
        %vm1427 = vcmask 7168
        %1428 = vst.msk [vmem:[#allocation3] sm:$0xff] %vm1427, %v1426
        %1429 = vst.msk [vmem:[#allocation2] sm:$0xff] %vm1427, %v1410
        %p1430 = scmp.eq.s32.totalorder %s41, 1
        // Predicated region
        $region101: #{tpu_custom_call.1} parent=79 // pred_check
          %p1431 = pneg %p1430
        $region102: #{tpu_custom_call.1} parent=79 // pred_check_branch
          %1433 = sbr.rel (%p1431) target = $region104
        $region103: #{tpu_custom_call.1} parent=79 // pred_region
          %v1434 = vld [vmem:[#allocation2] sm:$0xff]
          %v1435 = vld [vmem:[#allocation3] sm:$0xff]
          %v1436 = vlog2.pop %v1435
          %v1437 = vmul.f32 %v1436, 0.6931472
          %v1438 = vadd.f32 %v1434, %v1437
          %1439 = vst.msk [vmem:[%s16] sm:$0xff] %vm1427, %v1438
        $region104: #{tpu_custom_call.1} parent=79 // pred_fallthru
          _
        %s1440 = sand.u32 %s374, 1
        %s1441 = scalar_lea.sflag [#allocation7], %s1440
        %s1442 = sand.u32 %s374, 1
        %s1443 = smul.addr %s1442, 8
        %s1444 = scalar_lea.vmem [#allocation13], %s1443
        // Predicated region
        $region105: #{tpu_custom_call.1} parent=79 // pred_check
          %p1445 = pneg %p384
        $region106: #{tpu_custom_call.1} parent=79 // pred_check_branch
          %1447 = sbr.rel (%p1445) target = $region108
        $region107: #{tpu_custom_call.1} parent=79 // pred_region
          %1449 = vsyncadd %s1441, 0
          %s1450 = smul.addr %s41, 8
          %s1451 = scalar_lea.hbm %s15, %s1450
          %s1453 = sshll.u32 %s1444, 4
          %s1454 = int_to_ptr.vmem [resolvable:$true] %s1453
          %s1455 = sshll.u32 %s1451, 4
          %s1456 = int_to_ptr.hbm [resolvable:$true] %s1455
          %1458 = dma.vmem_to_hbm [thread:$0]  %s1454, 128, %s1456, %s1441
        $region108: #{tpu_custom_call.1} parent=79 // pred_fallthru
          _
        // Predicated region
        $region109: #{tpu_custom_call.1} parent=79 // pred_check
          %p1459 = pneg %p405
        $region110: #{tpu_custom_call.1} parent=79 // pred_check_branch
          %1461 = sbr.rel (%p1459) target = $region112
        $region111: #{tpu_custom_call.1} parent=79 // pred_region
          _
        $region112: #{tpu_custom_call.1} parent=79 // pred_fallthru
          _
        // Predicated region
        $region113: #{tpu_custom_call.1} parent=79 // pred_check
          %p1462 = pneg %p426
        $region114: #{tpu_custom_call.1} parent=79 // pred_check_branch
          %1464 = sbr.rel (%p1462) target = $region116
        $region115: #{tpu_custom_call.1} parent=79 // pred_region
          %1466 = vsyncadd [#allocation15], 0
          %s1468 = sshll.u32 [#allocation14], 4
          %s1469 = int_to_ptr.vmem [resolvable:$true] %s1468
          %s1470 = sshll.u32 %s17, 4
          %s1471 = int_to_ptr.hbm [resolvable:$true] %s1470
          %1473 = dma.vmem_to_hbm [thread:$0]  %s1469, 128, %s1471, [#allocation15]
        $region116: #{tpu_custom_call.1} parent=79 // pred_fallthru
          _
        // Predicated region
        $region117: #{tpu_custom_call.1} parent=79 // pred_check
          %p1474 = pneg %p447
        $region118: #{tpu_custom_call.1} parent=79 // pred_check_branch
          %1476 = sbr.rel (%p1474) target = $region120
        $region119: #{tpu_custom_call.1} parent=79 // pred_region
          %1478 = vsyncadd [#allocation15], 0
          %s1480 = sshll.u32 [#allocation16], 4
          %s1481 = int_to_ptr.vmem [resolvable:$true] %s1480
          %s1482 = sshll.u32 %s18, 4
          %s1483 = int_to_ptr.hbm [resolvable:$true] %s1482
          %1485 = dma.vmem_to_hbm [thread:$0]  %s1481, 128, %s1483, [#allocation15]
        $region120: #{tpu_custom_call.1} parent=79 // pred_fallthru
          _
        // Predicated region
        $region121: #{tpu_custom_call.1} parent=79 // pred_check
          %p1486 = pneg %p405
        $region122: #{tpu_custom_call.1} parent=79 // pred_check_branch
          %1488 = sbr.rel (%p1486) target = $region124
        $region123: #{tpu_custom_call.1} parent=79 // pred_region
          _
        $region124: #{tpu_custom_call.1} parent=79 // pred_fallthru
          _
        // Predicated region
        $region125: #{tpu_custom_call.1} parent=79 // pred_check
          %p1489 = pneg %p426
        $region126: #{tpu_custom_call.1} parent=79 // pred_check_branch
          %1491 = sbr.rel (%p1489) target = $region128
        $region127: #{tpu_custom_call.1} parent=79 // pred_region
          %1493 = dma.done [#allocation15], 128
        $region128: #{tpu_custom_call.1} parent=79 // pred_fallthru
          _
        // Predicated region
        $region129: #{tpu_custom_call.1} parent=79 // pred_check
          %p1494 = pneg %p447
        $region130: #{tpu_custom_call.1} parent=79 // pred_check_branch
          %1496 = sbr.rel (%p1494) target = $region132
        $region131: #{tpu_custom_call.1} parent=79 // pred_region
          %1498 = dma.done [#allocation15], 128
        $region132: #{tpu_custom_call.1} parent=79 // pred_fallthru
          _
      $region80: #{tpu_custom_call.1} parent=5 // pred_fallthru
        _
      %p1499 = scmp.le.s32.totalorder 2, %s36
      // Predicated region
      $region133: #{tpu_custom_call.1} parent=5 // pred_check
        %p1500 = pneg %p1499
      $region134: #{tpu_custom_call.1} parent=5 // pred_check_branch
        %1502 = sbr.rel (%p1500) target = $region136
      $region135: #{tpu_custom_call.1} parent=5 // pred_region
        %s1503 = ssub.s32 %s36, 2
        // Predicated region
        $region137: #{tpu_custom_call.1} parent=135 // pred_check
          %p1504 = pneg %p390
        $region138: #{tpu_custom_call.1} parent=135 // pred_check_branch
          %1506 = sbr.rel (%p1504) target = $region140
        $region139: #{tpu_custom_call.1} parent=135 // pred_region
          %s1507 = sand.u32 %s375, 1
          %s1508 = scalar_lea.sflag [#allocation7], %s1507
          %s1509 = sand.u32 %s375, 1
          %s1510 = smul.addr %s1509, 8
          %s1511 = scalar_lea.vmem [#allocation13], %s1510
          %1513 = dma.done %s1508, 128
        $region140: #{tpu_custom_call.1} parent=135 // pred_fallthru
          _
      $region136: #{tpu_custom_call.1} parent=5 // pred_fallthru
        _
    $region6: #{tpu_custom_call.1} parent=1 // loop_footer
      %s40 = sadd.s32 1, %s36
    $region7: #{tpu_custom_call.1} parent=1 // loop_footer_branch
      %35 = sbr.rel target = $region3
    $region8: #{tpu_custom_call.1} parent=1 // loop_exit
      _
    %1514 = vsyncpa [#allocation6], 1
    %s1515 = scalar_lea.sflag [#allocation6], 1
    %1516 = vsyncpa %s1515, 1
    %1517 = vsyncpa [#allocation9], 1
    %1518 = vsyncpa [#allocation12], 1
    %s1519 = scalar_lea.sflag [#allocation12], 1
    %1520 = vsyncpa %s1519, 1
    %1521 = vsyncpa [#allocation7], 1
    %s1522 = scalar_lea.sflag [#allocation7], 1
    %1523 = vsyncpa %s1522, 1
    %1524 = vsyncpa [#allocation15], 1

</llo_original>
